<compile_context>
chip_gen: v7x
topology: tpu7x:2x2x1
jax: 0.10.0
libtpu: 0.0.40
codegen_flags: <defaults>
</compile_context>

<pallas_src>
import math

import jax
import jax.numpy as jnp
from jax import lax
from jax.experimental import pallas as pl
from jax.experimental.pallas import tpu as pltpu


def _round_up(x, m):
    return (x + m - 1) // m * m


# ---------------------------------------------------------------------------
# Pallas kernel: fused  Y = W @ X + b ; out = Y * clamp(Y+3, 0, 6) / 6
#   W: (Coutp, Kp) bf16  (tiny, resident across the grid)
#   X: (Kp,  tm)  bf16  (im2col'd activation, tiled along the lane axis)
#   b: (Coutp, 1) f32
#   O: (Coutp, tm) f32  -- Cout on sublanes, spatial on lanes (lane-dense).
# ---------------------------------------------------------------------------
def _gemm_bias_hardswish_kernel(w_ref, x_ref, b_ref, o_ref):
    y = jnp.dot(w_ref[...], x_ref[...], preferred_element_type=jnp.float32)
    y = y + b_ref[...]                      # (Coutp, 1) broadcasts over lanes
    act = jnp.clip(y + 3.0, 0.0, 6.0)
    o_ref[...] = y * act * (1.0 / 6.0)


def gemm_bias_hardswish_T(w_matT, x_matT, bias, *, tm=512):
    """w_matT: (Cout, K), x_matT: (K, M), bias: (Cout,) -> (Cout, M) f32."""
    cout, k = w_matT.shape
    _, m = x_matT.shape
    coutp = _round_up(cout, 16)          # bf16 sublane tile is 16
    kp = _round_up(k, 128)
    mp = _round_up(m, tm)

    wp = jnp.pad(w_matT, ((0, coutp - cout), (0, kp - k))).astype(jnp.bfloat16)
    xp = jnp.pad(x_matT, ((0, kp - k), (0, mp - m))).astype(jnp.bfloat16)
    bp = jnp.pad(bias, (0, coutp - cout)).astype(jnp.float32).reshape(coutp, 1)

    out = pl.pallas_call(
        _gemm_bias_hardswish_kernel,
        out_shape=jax.ShapeDtypeStruct((coutp, mp), jnp.float32),
        grid_spec=pltpu.PrefetchScalarGridSpec(
            num_scalar_prefetch=0,
            grid=(mp // tm,),
            in_specs=[
                pl.BlockSpec((coutp, kp), lambda i: (0, 0)),   # W resident
                pl.BlockSpec((kp, tm), lambda i: (0, i)),      # X tile
                pl.BlockSpec((coutp, 1), lambda i: (0, 0)),    # bias resident
            ],
            out_specs=pl.BlockSpec((coutp, tm), lambda i: (0, i)),
        ),
        compiler_params=pltpu.CompilerParams(
            dimension_semantics=("parallel",)),
    )(wp, xp, bp)
    return out[:cout, :m]


# ---------------------------------------------------------------------------
# Transposed conv (PyTorch semantics) + fused hardswish, via the Pallas GEMM.
# Activations use the "CNHW" layout (Cin, N, H, W) so no transposes are needed
# between layers or around the im2col.
# ---------------------------------------------------------------------------
def conv_transpose2d_hardswish_cnhw(x_cnhw, weight, bias, stride, padding,
                                    dilation, output_padding):
    """x_cnhw: (Cin, N, H, W); weight: (Cin, Cout, kh, kw) (PyTorch layout).

    Returns (Cout, N, Ho, Wo)."""
    cin, n, h, w_in = x_cnhw.shape
    _, cout, kh, kw = weight.shape
    sh, sw = stride
    ph, pw = padding
    dh, dw = dilation
    oph, opw = output_padding

    # 1) zero-insertion upsample (stride of the transposed conv)
    # TODO(synk): sub-pixel (stride) decomposition would avoid feeding the MXU
    # K-columns of inserted zeros; skipped here -- the GEMM is a few MFLOPs and
    # the orientation/bf16/layout fixes dominate at these sizes.
    hu = (h - 1) * sh + 1
    wu = (w_in - 1) * sw + 1
    xu = jnp.zeros((cin, n, hu, wu), x_cnhw.dtype)
    xu = xu.at[:, :, ::sh, ::sw].set(x_cnhw)

    # 2) pad: lo = d*(k-1) - p ; hi = lo + output_padding
    plo_h = dh * (kh - 1) - ph
    plo_w = dw * (kw - 1) - pw
    assert plo_h >= 0 and plo_w >= 0, "negative implicit padding unsupported"
    xpad = jnp.pad(xu, ((0, 0), (0, 0),
                        (plo_h, plo_h + oph),
                        (plo_w, plo_w + opw)))

    # 3) im2col in the transposed orientation: rows = Cin*kh*kw, cols = N*Ho*Wo
    hp, wp = xpad.shape[2], xpad.shape[3]
    ho = hp - dh * (kh - 1)
    wo = wp - dw * (kw - 1)
    taps = []
    for a in range(kh):
        for b in range(kw):
            taps.append(xpad[:, :, a * dh:a * dh + ho, b * dw:b * dw + wo])
    # (Cin, kh*kw, N, Ho, Wo) -> (Cin*kh*kw, N*Ho*Wo): contiguous merges only.
    x_matT = jnp.stack(taps, axis=1).reshape(cin * kh * kw, n * ho * wo)

    # flipped weight as (Cout, Cin*kh*kw); column order matches x_matT rows.
    w_flip = weight[:, :, ::-1, ::-1]                    # (Cin, Cout, kh, kw)
    w_matT = w_flip.transpose(1, 0, 2, 3).reshape(cout, cin * kh * kw)

    # 4) fused GEMM + bias + hardswish in Pallas
    y_matT = gemm_bias_hardswish_T(w_matT, x_matT, bias)
    return y_matT.reshape(cout, n, ho, wo)


def model_forward(x, params):
    w1, b1, w2, b2 = params
    x_cnhw = jnp.transpose(x, (1, 0, 2, 3))          # NCHW -> CNHW (once)
    # v1..v6: conv1_transpose + hardswish
    v6 = conv_transpose2d_hardswish_cnhw(x_cnhw, w1, b1, stride=(3, 4),
                                         padding=(1, 2), dilation=(2, 2),
                                         output_padding=(3, 3))
    # v7..v12: conv2_transpose + hardswish
    v12 = conv_transpose2d_hardswish_cnhw(v6, w2, b2, stride=(2, 2),
                                          padding=(2, 1), dilation=(2, 2),
                                          output_padding=(1, 1))
    return jnp.transpose(v12, (1, 0, 2, 3))          # CNHW -> NCHW (once)


# ---------------------------------------------------------------------------
# Pure-JAX reference (lax.conv_general_dilated) for the correctness check
# ---------------------------------------------------------------------------
def _ref_conv_transpose(x, weight, bias, stride, padding, dilation,
                        output_padding):
    cin, cout, kh, kw = weight.shape
    dh, dw = dilation
    ph, pw = padding
    oph, opw = output_padding
    w_oihw = weight[:, :, ::-1, ::-1].transpose(1, 0, 2, 3)
    lo_h = dh * (kh - 1) - ph
    lo_w = dw * (kw - 1) - pw
    y = lax.conv_general_dilated(
        x, w_oihw, window_strides=(1, 1),
        padding=[(lo_h, lo_h + oph), (lo_w, lo_w + opw)],
        lhs_dilation=stride, rhs_dilation=dilation,
        dimension_numbers=('NCHW', 'OIHW', 'NCHW'),
        precision=lax.Precision.HIGHEST)
    return y + bias.reshape(1, -1, 1, 1)


def _ref_forward(x, params):
    w1, b1, w2, b2 = params

    def hsw(y):
        return y * jnp.clip(y + 3.0, 0.0, 6.0) / 6.0

    v1 = _ref_conv_transpose(x, w1, b1, (3, 4), (1, 2), (2, 2), (3, 3))
    v6 = hsw(v1)
    v7 = _ref_conv_transpose(v6, w2, b2, (2, 2), (2, 1), (2, 2), (1, 1))
    return hsw(v7)


if __name__ == "__main__":
    key = jax.random.PRNGKey(0)
    kx, k1, k2, k3, k4 = jax.random.split(key, 5)

    # Small spatial size; channels fixed by the module (17 -> 4 -> 9).
    N, Cin, H, W = 1, 17, 8, 8
    x = jax.random.normal(kx, (N, Cin, H, W), jnp.float32)

    bnd1 = 1.0 / math.sqrt(17 * 3 * 5)
    w1 = jax.random.uniform(k1, (17, 4, 3, 5), jnp.float32, -bnd1, bnd1)
    b1 = jax.random.uniform(k2, (4,), jnp.float32, -bnd1, bnd1)
    bnd2 = 1.0 / math.sqrt(4 * 5 * 3)
    w2 = jax.random.uniform(k3, (4, 9, 5, 3), jnp.float32, -bnd2, bnd2)
    b2 = jax.random.uniform(k4, (9,), jnp.float32, -bnd2, bnd2)
    params = (w1, b1, w2, b2)

    fwd = jax.jit(model_forward)
    out = jax.block_until_ready(fwd(x, params))

    ref = _ref_forward(x, params)
    assert out.shape == ref.shape, (out.shape, ref.shape)
    if not jnp.allclose(out, ref, atol=2e-2, rtol=2e-2):
        raise AssertionError(
            f"mismatch, max abs err = {float(jnp.max(jnp.abs(out - ref)))}")
    print("KERNEL_OK")
</pallas_src>

<mosaic_0001>
module attributes {stable_mosaic.version = 11 : i64} {
  func.func @_gemm_bias_hardswish_kernel(%arg0: i32, %arg1: memref<16x256xbf16, #tpu.memory_space<vmem>>, %arg2: memref<256x512xbf16, #tpu.memory_space<vmem>>, %arg3: memref<16x1xf32, #tpu.memory_space<vmem>>, %arg4: memref<16x512xf32, #tpu.memory_space<vmem>>) attributes {dimension_semantics = [#tpu.dimension_semantics<parallel>], iteration_bounds = array<i64: 2>, scalar_prefetch = 0 : i64, scratch_operands = 0 : i64, tpu.core_type = #tpu.core_type<tc>, window_params = [{pipeline_mode = #tpu.pipeline_mode<synchronous>, transform_indices = @transform_0, window_bounds = array<i64: 16, 256>}, {transform_indices = @transform_1, window_bounds = array<i64: 256, 512>}, {pipeline_mode = #tpu.pipeline_mode<synchronous>, transform_indices = @transform_2, window_bounds = array<i64: 16, 1>}, {transform_indices = @transform_3, window_bounds = array<i64: 16, 512>}]} {
    %c0 = arith.constant 0 : index
    %c0_0 = arith.constant 0 : index
    %0 = vector.load %arg1[%c0, %c0_0] : memref<16x256xbf16, #tpu.memory_space<vmem>>, vector<16x256xbf16>
    %c0_1 = arith.constant 0 : index
    %c0_2 = arith.constant 0 : index
    %1 = vector.load %arg2[%c0_1, %c0_2] : memref<256x512xbf16, #tpu.memory_space<vmem>>, vector<256x512xbf16>
    %cst = arith.constant dense<0.000000e+00> : vector<16x512xf32>
    %2 = tpu.matmul %0, %1, %cst {dimension_numbers = #tpu.dot_dimension_numbers<[1], [0], [0], [1], [0, 0, 1, 1], [], []>} : vector<16x256xbf16>, vector<256x512xbf16>, vector<16x512xf32> -> vector<16x512xf32>
    %c0_3 = arith.constant 0 : index
    %c0_4 = arith.constant 0 : index
    %3 = vector.load %arg3[%c0_3, %c0_4] : memref<16x1xf32, #tpu.memory_space<vmem>>, vector<16x1xf32>
    %4 = vector.broadcast %3 : vector<16x1xf32> to vector<16x512xf32>
    %5 = arith.addf %2, %4 : vector<16x512xf32>
    %cst_5 = arith.constant 3.000000e+00 : f32
    %6 = vector.broadcast %cst_5 : f32 to vector<16x512xf32>
    %7 = arith.addf %5, %6 : vector<16x512xf32>
    %cst_6 = arith.constant 0.000000e+00 : f32
    %cst_7 = arith.constant 6.000000e+00 : f32
    %8 = vector.broadcast %cst_6 : f32 to vector<16x512xf32>
    %9 = arith.maximumf %8, %7 : vector<16x512xf32>
    %10 = vector.broadcast %cst_7 : f32 to vector<16x512xf32>
    %11 = arith.minimumf %10, %9 : vector<16x512xf32>
    %12 = arith.mulf %5, %11 : vector<16x512xf32>
    %cst_8 = arith.constant 0.166666672 : f32
    %13 = vector.broadcast %cst_8 : f32 to vector<16x512xf32>
    %14 = arith.mulf %12, %13 : vector<16x512xf32>
    %c0_9 = arith.constant 0 : index
    %c0_10 = arith.constant 0 : index
    %15 = vector.load %arg4[%c0_9, %c0_10] : memref<16x512xf32, #tpu.memory_space<vmem>>, vector<16x512xf32>
    tpu.vector_store %arg4[%c0_9, %c0_10], %14 {strides = array<i32>} : memref<16x512xf32, #tpu.memory_space<vmem>>, vector<16x512xf32>,
    return
  }
  func.func @transform_0(%arg0: i32) -> (i32, i32) {
    %c0_i32 = arith.constant 0 : i32
    %c0_i32_0 = arith.constant 0 : i32
    %c0_i32_1 = arith.constant 0 : i32
    return %c0_i32, %c0_i32_0 : i32, i32
  }
  func.func @transform_1(%arg0: i32) -> (i32, i32) {
    %c0_i32 = arith.constant 0 : i32
    %c0_i32_0 = arith.constant 0 : i32
    return %c0_i32, %arg0 : i32, i32
  }
  func.func @transform_2(%arg0: i32) -> (i32, i32) {
    %c0_i32 = arith.constant 0 : i32
    %c0_i32_0 = arith.constant 0 : i32
    %c0_i32_1 = arith.constant 0 : i32
    return %c0_i32, %c0_i32_0 : i32, i32
  }
  func.func @transform_3(%arg0: i32) -> (i32, i32) {
    %c0_i32 = arith.constant 0 : i32
    %c0_i32_0 = arith.constant 0 : i32
    return %c0_i32, %arg0 : i32, i32
  }
}

module attributes {stable_mosaic.version = 11 : i64} {
  func.func @_gemm_bias_hardswish_kernel(%arg0: i32, %arg1: memref<16x128xbf16, #tpu.memory_space<vmem>>, %arg2: memref<128x512xbf16, #tpu.memory_space<vmem>>, %arg3: memref<16x1xf32, #tpu.memory_space<vmem>>, %arg4: memref<16x512xf32, #tpu.memory_space<vmem>>) attributes {dimension_semantics = [#tpu.dimension_semantics<parallel>], iteration_bounds = array<i64: 9>, scalar_prefetch = 0 : i64, scratch_operands = 0 : i64, tpu.core_type = #tpu.core_type<tc>, window_params = [{pipeline_mode = #tpu.pipeline_mode<synchronous>, transform_indices = @transform_0, window_bounds = array<i64: 16, 128>}, {transform_indices = @transform_1, window_bounds = array<i64: 128, 512>}, {pipeline_mode = #tpu.pipeline_mode<synchronous>, transform_indices = @transform_2, window_bounds = array<i64: 16, 1>}, {transform_indices = @transform_3, window_bounds = array<i64: 16, 512>}]} {
    %c0 = arith.constant 0 : index
    %c0_0 = arith.constant 0 : index
    %0 = vector.load %arg1[%c0, %c0_0] : memref<16x128xbf16, #tpu.memory_space<vmem>>, vector<16x128xbf16>
    %c0_1 = arith.constant 0 : index
    %c0_2 = arith.constant 0 : index
    %1 = vector.load %arg2[%c0_1, %c0_2] : memref<128x512xbf16, #tpu.memory_space<vmem>>, vector<128x512xbf16>
    %cst = arith.constant dense<0.000000e+00> : vector<16x512xf32>
    %2 = tpu.matmul %0, %1, %cst {dimension_numbers = #tpu.dot_dimension_numbers<[1], [0], [0], [1], [0, 0, 1, 1], [], []>} : vector<16x128xbf16>, vector<128x512xbf16>, vector<16x512xf32> -> vector<16x512xf32>
    %c0_3 = arith.constant 0 : index
    %c0_4 = arith.constant 0 : index
    %3 = vector.load %arg3[%c0_3, %c0_4] : memref<16x1xf32, #tpu.memory_space<vmem>>, vector<16x1xf32>
    %4 = vector.broadcast %3 : vector<16x1xf32> to vector<16x512xf32>
    %5 = arith.addf %2, %4 : vector<16x512xf32>
    %cst_5 = arith.constant 3.000000e+00 : f32
    %6 = vector.broadcast %cst_5 : f32 to vector<16x512xf32>
    %7 = arith.addf %5, %6 : vector<16x512xf32>
    %cst_6 = arith.constant 0.000000e+00 : f32
    %cst_7 = arith.constant 6.000000e+00 : f32
    %8 = vector.broadcast %cst_6 : f32 to vector<16x512xf32>
    %9 = arith.maximumf %8, %7 : vector<16x512xf32>
    %10 = vector.broadcast %cst_7 : f32 to vector<16x512xf32>
    %11 = arith.minimumf %10, %9 : vector<16x512xf32>
    %12 = arith.mulf %5, %11 : vector<16x512xf32>
    %cst_8 = arith.constant 0.166666672 : f32
    %13 = vector.broadcast %cst_8 : f32 to vector<16x512xf32>
    %14 = arith.mulf %12, %13 : vector<16x512xf32>
    %c0_9 = arith.constant 0 : index
    %c0_10 = arith.constant 0 : index
    %15 = vector.load %arg4[%c0_9, %c0_10] : memref<16x512xf32, #tpu.memory_space<vmem>>, vector<16x512xf32>
    tpu.vector_store %arg4[%c0_9, %c0_10], %14 {strides = array<i32>} : memref<16x512xf32, #tpu.memory_space<vmem>>, vector<16x512xf32>,
    return
  }
  func.func @transform_0(%arg0: i32) -> (i32, i32) {
    %c0_i32 = arith.constant 0 : i32
    %c0_i32_0 = arith.constant 0 : i32
    %c0_i32_1 = arith.constant 0 : i32
    return %c0_i32, %c0_i32_0 : i32, i32
  }
  func.func @transform_1(%arg0: i32) -> (i32, i32) {
    %c0_i32 = arith.constant 0 : i32
    %c0_i32_0 = arith.constant 0 : i32
    return %c0_i32, %arg0 : i32, i32
  }
  func.func @transform_2(%arg0: i32) -> (i32, i32) {
    %c0_i32 = arith.constant 0 : i32
    %c0_i32_0 = arith.constant 0 : i32
    %c0_i32_1 = arith.constant 0 : i32
    return %c0_i32, %c0_i32_0 : i32, i32
  }
  func.func @transform_3(%arg0: i32) -> (i32, i32) {
    %c0_i32 = arith.constant 0 : i32
    %c0_i32_0 = arith.constant 0 : i32
    return %c0_i32, %arg0 : i32, i32
  }
}

</mosaic_0001>

<llo_original>
// kernel: model_forward.2
$region0: #{model_forward.2}
  #allocation0 [shape = 'u32[]', space=smem, size = 0x4, offset = 0x4, fixed_abs, tag = 'smem constant byte address 0x4 - core index']
  #allocation1 [shape = 'u32[144,128]{1,0:T(1,128)}', space=vmem, size = 0x12000, scoped, tag = 'internal scratch']
  %s0 = inlined_call_operand.vmem [shape: bf16[16,256], index: 0, kind: input, shape index: {}]
  %s1 = inlined_call_operand.vmem [shape: bf16[256,1024], index: 1, kind: input, shape index: {}]
  %s2 = inlined_call_operand.vmem [shape: f32[16,1], index: 2, kind: input, shape index: {}]
  %s3 = inlined_call_operand.vmem [shape: f32[16,1024], index: 3, kind: output, shape index: {}]
  %s4 = sld [smem:[#allocation0]]
  $region87: #{model_forward.2} parent=0
    _
  %s6 = ssub.s32 1, %s4
  %s7 = scalar_select 0, %s6, %s4
  $region1: #{model_forward.2} parent=0
    #allocation2 [shape = 'u8[524288]{0}', space=vmem, size = 0x80000, scoped, tag = 'input window, operand 1']
    #allocation3 [shape = 'u8[65536]{0}', space=vmem, size = 0x10000, scoped, tag = 'output window, operand 0']
    loop: start=0, step=1, limit=4
    $region2: #{model_forward.2} parent=1 // loop_pre_header
      _
    $region3: #{model_forward.2} parent=1 // loop_header
      %s9 = sphi 0, %s13
      %p10 = scmp.ge.s32.totalorder %s9, 4
      %s17 = sphi 0, %s17
      %s19 = sphi 0, %s17
      %s20 = sphi 0, %s19
      %s34 = sphi 0, %s20
      %s40 = sphi 0, %s42
      %s43 = sphi 0, %s40
      %s44 = sphi 0, %s43
      %s60 = sphi 0, %s44
      %s64 = sphi 0, %s64
      %s66 = sphi 0, %s64
      %s67 = sphi 0, %s66
      %s81 = sphi 0, %s67
      %s87 = sphi 0, %s89
      %s90 = sphi 0, %s87
      %s91 = sphi 0, %s90
      %s107 = sphi 0, %s91
    $region4: #{model_forward.2} parent=1 // loop_header_branch
      %12 = sbr.rel (%p10) target = $region8
    $region5: #{model_forward.2} parent=1 // loop_body
      %s14 = ssub.s32 %s9, 1
      %s15 = ssub.s32 %s9, 2
      %s16 = sadd.s32 %s9, 1
      %s18 = sadd.s32 %s17, 1
      %p21 = scmp.eq.s32.totalorder %s9, 1
      %p22 = scmp.ne.s32.totalorder %s17, %s19
      %p23 = scmp.eq.s32.totalorder %s9, 0
      %p24 = por %p22, %p23
      %p25 = scmp.ne.s32.totalorder %s17, %s19
      %p26 = scmp.eq.s32.totalorder %s14, 1
      %p27 = por %p25, %p26
      %p28 = scmp.ne.s32.totalorder %s19, %s20
      %p29 = scmp.eq.s32.totalorder %s14, 0
      %p30 = por %p28, %p29
      %p31 = scmp.ne.s32.totalorder %s19, %s20
      %p32 = scmp.eq.s32.totalorder %s15, 1
      %p33 = por %p31, %p32
      %p35 = scmp.ne.s32.totalorder %s20, %s34
      %p36 = scmp.eq.s32.totalorder %s15, 0
      %p37 = por %p35, %p36
      %s38 = ssub.s32 %s9, %s16
      %p39 = scmp.eq.s32.totalorder %s38, 0
      %s41 = sadd.s32 %s40, 1
      %s42 = scalar_select %p39, %s40, %s41
      %p45 = pneg %p39
      %p46 = scmp.eq.s32.totalorder %s9, 1
      %p47 = por %p45, %p46
      %p48 = scmp.ne.s32.totalorder %s40, %s43
      %p49 = scmp.eq.s32.totalorder %s9, 0
      %p50 = por %p48, %p49
      %p51 = scmp.ne.s32.totalorder %s40, %s43
      %p52 = scmp.eq.s32.totalorder %s14, 1
      %p53 = por %p51, %p52
      %p54 = scmp.ne.s32.totalorder %s43, %s44
      %p55 = scmp.eq.s32.totalorder %s14, 0
      %p56 = por %p54, %p55
      %p57 = scmp.ne.s32.totalorder %s43, %s44
      %p58 = scmp.eq.s32.totalorder %s15, 1
      %p59 = por %p57, %p58
      %p61 = scmp.ne.s32.totalorder %s44, %s60
      %p62 = scmp.eq.s32.totalorder %s15, 0
      %p63 = por %p61, %p62
      %s65 = sadd.s32 %s64, 1
      %p68 = scmp.eq.s32.totalorder %s9, 1
      %p69 = scmp.ne.s32.totalorder %s64, %s66
      %p70 = scmp.eq.s32.totalorder %s9, 0
      %p71 = por %p69, %p70
      %p72 = scmp.ne.s32.totalorder %s64, %s66
      %p73 = scmp.eq.s32.totalorder %s14, 1
      %p74 = por %p72, %p73
      %p75 = scmp.ne.s32.totalorder %s66, %s67
      %p76 = scmp.eq.s32.totalorder %s14, 0
      %p77 = por %p75, %p76
      %p78 = scmp.ne.s32.totalorder %s66, %s67
      %p79 = scmp.eq.s32.totalorder %s15, 1
      %p80 = por %p78, %p79
      %p82 = scmp.ne.s32.totalorder %s67, %s81
      %p83 = scmp.eq.s32.totalorder %s15, 0
      %p84 = por %p82, %p83
      %s85 = ssub.s32 %s9, %s16
      %p86 = scmp.eq.s32.totalorder %s85, 0
      %s88 = sadd.s32 %s87, 1
      %s89 = scalar_select %p86, %s87, %s88
      %p92 = pneg %p86
      %p93 = scmp.eq.s32.totalorder %s9, 1
      %p94 = por %p92, %p93
      %p95 = scmp.ne.s32.totalorder %s87, %s90
      %p96 = scmp.eq.s32.totalorder %s9, 0
      %p97 = por %p95, %p96
      %p98 = scmp.ne.s32.totalorder %s87, %s90
      %p99 = scmp.eq.s32.totalorder %s14, 1
      %p100 = por %p98, %p99
      %p101 = scmp.ne.s32.totalorder %s90, %s91
      %p102 = scmp.eq.s32.totalorder %s14, 0
      %p103 = por %p101, %p102
      %p104 = scmp.ne.s32.totalorder %s90, %s91
      %p105 = scmp.eq.s32.totalorder %s15, 1
      %p106 = por %p104, %p105
      %p108 = scmp.ne.s32.totalorder %s91, %s107
      %p109 = scmp.eq.s32.totalorder %s15, 0
      %p110 = por %p108, %p109
      %p111 = scmp.le.s32.totalorder 1, %s9
      %p112 = scmp.lt.s32.totalorder %s9, 3
      %p113 = pnand %p111, %p112
      %p114 = pneg %p113
      // Predicated region
      $region9: #{model_forward.2} parent=5 // pred_check
        _
      $region10: #{model_forward.2} parent=5 // pred_check_branch
        %116 = sbr.rel (%p113) target = $region12
      $region11: #{model_forward.2} parent=5 // pred_region
        %s117 = ssub.s32 %s9, 1
        // Predicated region
        $region13: #{model_forward.2} parent=11 // pred_check
          %p118 = pneg %p30
        $region14: #{model_forward.2} parent=11 // pred_check_branch
          %120 = sbr.rel (%p118) target = $region16
        $region15: #{model_forward.2} parent=11 // pred_region
          _
        $region16: #{model_forward.2} parent=11 // pred_fallthru
          _
        // Predicated region
        $region17: #{model_forward.2} parent=11 // pred_check
          %p121 = pneg %p77
        $region18: #{model_forward.2} parent=11 // pred_check_branch
          %123 = sbr.rel (%p121) target = $region20
        $region19: #{model_forward.2} parent=11 // pred_region
          _
        $region20: #{model_forward.2} parent=11 // pred_fallthru
          _
      $region12: #{model_forward.2} parent=5 // pred_fallthru
        _
      %p124 = scmp.lt.s32.totalorder %s9, 2
      // Predicated region
      $region21: #{model_forward.2} parent=5 // pred_check
        %p125 = pneg %p124
      $region22: #{model_forward.2} parent=5 // pred_check_branch
        %127 = sbr.rel (%p125) target = $region24
      $region23: #{model_forward.2} parent=5 // pred_region
        // Predicated region
        $region25: #{model_forward.2} parent=23 // pred_check
          %p128 = pneg %p50
        $region26: #{model_forward.2} parent=23 // pred_check_branch
          %130 = sbr.rel (%p128) target = $region28
        $region27: #{model_forward.2} parent=23 // pred_region
          %s131 = sand.u32 %s40, 1
          %s132 = sand.u32 %s40, 1
          %s133 = smul.addr %s132, 512
          %s134 = scalar_lea.vmem [#allocation2], %s133
          %s135 = smul.u32 4, %s9
          %s136 = smul.addr %s135, 4
          %s137 = scalar_lea.vmem %s1, %s136
          // Predicated region
          $region29: #{model_forward.2} parent=27 // pred_check
            _
          $region30: #{model_forward.2} parent=27 // pred_check_branch
            %139 = sbr.rel (0) target = $region32
          $region31: #{model_forward.2} parent=27 // pred_region
            // Predicated region
            $region33: #{model_forward.2} parent=31 // pred_check
              _
            $region34: #{model_forward.2} parent=31 // pred_check_branch
              %141 = sbr.rel (0) target = $region36
            $region35: #{model_forward.2} parent=31 // pred_region
              loop: start=0, step=1, limit=1
              $region37: #{model_forward.2} parent=35 // loop_pre_header
                _
              $region38: #{model_forward.2} parent=35 // loop_header
                %s143 = sphi 0, %s147
                %p144 = scmp.ge.s32.totalorder %s143, 1
                %s148 = sphi %s137, %s137
                %s149 = sphi %s134, %s134
              $region39: #{model_forward.2} parent=35 // loop_header_branch
                %146 = sbr.rel (%p144) target = $region43
              $region40: #{model_forward.2} parent=35 // loop_body
                %v150 = vld [vmem:[%s148] sm:$0xff]
                %151 = vst [vmem:[%s149] sm:$0xff] %v150
                %v152 = vld [vmem:[%s148 + $0x8] sm:$0xff]
                %153 = vst [vmem:[%s149 + $0x8] sm:$0xff] %v152
                %v154 = vld [vmem:[%s148 + $0x20] sm:$0xff]
                %155 = vst [vmem:[%s149 + $0x10] sm:$0xff] %v154
                %v156 = vld [vmem:[%s148 + $0x28] sm:$0xff]
                %157 = vst [vmem:[%s149 + $0x18] sm:$0xff] %v156
                %v158 = vld [vmem:[%s148 + $0x40] sm:$0xff]
                %159 = vst [vmem:[%s149 + $0x20] sm:$0xff] %v158
                %v160 = vld [vmem:[%s148 + $0x48] sm:$0xff]
                %161 = vst [vmem:[%s149 + $0x28] sm:$0xff] %v160
                %v162 = vld [vmem:[%s148 + $0x60] sm:$0xff]
                %163 = vst [vmem:[%s149 + $0x30] sm:$0xff] %v162
                %v164 = vld [vmem:[%s148 + $0x68] sm:$0xff]
                %165 = vst [vmem:[%s149 + $0x38] sm:$0xff] %v164
                %v166 = vld [vmem:[%s148 + $0x80] sm:$0xff]
                %167 = vst [vmem:[%s149 + $0x40] sm:$0xff] %v166
                %v168 = vld [vmem:[%s148 + $0x88] sm:$0xff]
                %169 = vst [vmem:[%s149 + $0x48] sm:$0xff] %v168
                %v170 = vld [vmem:[%s148 + $0xa0] sm:$0xff]
                %171 = vst [vmem:[%s149 + $0x50] sm:$0xff] %v170
                %v172 = vld [vmem:[%s148 + $0xa8] sm:$0xff]
                %173 = vst [vmem:[%s149 + $0x58] sm:$0xff] %v172
                %v174 = vld [vmem:[%s148 + $0xc0] sm:$0xff]
                %175 = vst [vmem:[%s149 + $0x60] sm:$0xff] %v174
                %v176 = vld [vmem:[%s148 + $0xc8] sm:$0xff]
                %177 = vst [vmem:[%s149 + $0x68] sm:$0xff] %v176
                %v178 = vld [vmem:[%s148 + $0xe0] sm:$0xff]
                %179 = vst [vmem:[%s149 + $0x70] sm:$0xff] %v178
                %v180 = vld [vmem:[%s148 + $0xe8] sm:$0xff]
                %181 = vst [vmem:[%s149 + $0x78] sm:$0xff] %v180
                %v182 = vld [vmem:[%s148 + $0x100] sm:$0xff]
                %183 = vst [vmem:[%s149 + $0x80] sm:$0xff] %v182
                %v184 = vld [vmem:[%s148 + $0x108] sm:$0xff]
                %185 = vst [vmem:[%s149 + $0x88] sm:$0xff] %v184
                %v186 = vld [vmem:[%s148 + $0x120] sm:$0xff]
                %187 = vst [vmem:[%s149 + $0x90] sm:$0xff] %v186
                %v188 = vld [vmem:[%s148 + $0x128] sm:$0xff]
                %189 = vst [vmem:[%s149 + $0x98] sm:$0xff] %v188
                %v190 = vld [vmem:[%s148 + $0x140] sm:$0xff]
                %191 = vst [vmem:[%s149 + $0xa0] sm:$0xff] %v190
                %v192 = vld [vmem:[%s148 + $0x148] sm:$0xff]
                %193 = vst [vmem:[%s149 + $0xa8] sm:$0xff] %v192
                %v194 = vld [vmem:[%s148 + $0x160] sm:$0xff]
                %195 = vst [vmem:[%s149 + $0xb0] sm:$0xff] %v194
                %v196 = vld [vmem:[%s148 + $0x168] sm:$0xff]
                %197 = vst [vmem:[%s149 + $0xb8] sm:$0xff] %v196
                %v198 = vld [vmem:[%s148 + $0x180] sm:$0xff]
                %199 = vst [vmem:[%s149 + $0xc0] sm:$0xff] %v198
                %v200 = vld [vmem:[%s148 + $0x188] sm:$0xff]
                %201 = vst [vmem:[%s149 + $0xc8] sm:$0xff] %v200
                %v202 = vld [vmem:[%s148 + $0x1a0] sm:$0xff]
                %203 = vst [vmem:[%s149 + $0xd0] sm:$0xff] %v202
                %v204 = vld [vmem:[%s148 + $0x1a8] sm:$0xff]
                %205 = vst [vmem:[%s149 + $0xd8] sm:$0xff] %v204
                %v206 = vld [vmem:[%s148 + $0x1c0] sm:$0xff]
                %207 = vst [vmem:[%s149 + $0xe0] sm:$0xff] %v206
                %v208 = vld [vmem:[%s148 + $0x1c8] sm:$0xff]
                %209 = vst [vmem:[%s149 + $0xe8] sm:$0xff] %v208
                %v210 = vld [vmem:[%s148 + $0x1e0] sm:$0xff]
                %211 = vst [vmem:[%s149 + $0xf0] sm:$0xff] %v210
                %v212 = vld [vmem:[%s148 + $0x1e8] sm:$0xff]
                %213 = vst [vmem:[%s149 + $0xf8] sm:$0xff] %v212
                %v214 = vld [vmem:[%s148 + $0x200] sm:$0xff]
                %215 = vst [vmem:[%s149 + $0x100] sm:$0xff] %v214
                %v216 = vld [vmem:[%s148 + $0x208] sm:$0xff]
                %217 = vst [vmem:[%s149 + $0x108] sm:$0xff] %v216
                %v218 = vld [vmem:[%s148 + $0x220] sm:$0xff]
                %219 = vst [vmem:[%s149 + $0x110] sm:$0xff] %v218
                %v220 = vld [vmem:[%s148 + $0x228] sm:$0xff]
                %221 = vst [vmem:[%s149 + $0x118] sm:$0xff] %v220
                %v222 = vld [vmem:[%s148 + $0x240] sm:$0xff]
                %223 = vst [vmem:[%s149 + $0x120] sm:$0xff] %v222
                %v224 = vld [vmem:[%s148 + $0x248] sm:$0xff]
                %225 = vst [vmem:[%s149 + $0x128] sm:$0xff] %v224
                %v226 = vld [vmem:[%s148 + $0x260] sm:$0xff]
                %227 = vst [vmem:[%s149 + $0x130] sm:$0xff] %v226
                %v228 = vld [vmem:[%s148 + $0x268] sm:$0xff]
                %229 = vst [vmem:[%s149 + $0x138] sm:$0xff] %v228
                %v230 = vld [vmem:[%s148 + $0x280] sm:$0xff]
                %231 = vst [vmem:[%s149 + $0x140] sm:$0xff] %v230
                %v232 = vld [vmem:[%s148 + $0x288] sm:$0xff]
                %233 = vst [vmem:[%s149 + $0x148] sm:$0xff] %v232
                %v234 = vld [vmem:[%s148 + $0x2a0] sm:$0xff]
                %235 = vst [vmem:[%s149 + $0x150] sm:$0xff] %v234
                %v236 = vld [vmem:[%s148 + $0x2a8] sm:$0xff]
                %237 = vst [vmem:[%s149 + $0x158] sm:$0xff] %v236
                %v238 = vld [vmem:[%s148 + $0x2c0] sm:$0xff]
                %239 = vst [vmem:[%s149 + $0x160] sm:$0xff] %v238
                %v240 = vld [vmem:[%s148 + $0x2c8] sm:$0xff]
                %241 = vst [vmem:[%s149 + $0x168] sm:$0xff] %v240
                %v242 = vld [vmem:[%s148 + $0x2e0] sm:$0xff]
                %243 = vst [vmem:[%s149 + $0x170] sm:$0xff] %v242
                %v244 = vld [vmem:[%s148 + $0x2e8] sm:$0xff]
                %245 = vst [vmem:[%s149 + $0x178] sm:$0xff] %v244
                %v246 = vld [vmem:[%s148 + $0x300] sm:$0xff]
                %247 = vst [vmem:[%s149 + $0x180] sm:$0xff] %v246
                %v248 = vld [vmem:[%s148 + $0x308] sm:$0xff]
                %249 = vst [vmem:[%s149 + $0x188] sm:$0xff] %v248
                %v250 = vld [vmem:[%s148 + $0x320] sm:$0xff]
                %251 = vst [vmem:[%s149 + $0x190] sm:$0xff] %v250
                %v252 = vld [vmem:[%s148 + $0x328] sm:$0xff]
                %253 = vst [vmem:[%s149 + $0x198] sm:$0xff] %v252
                %v254 = vld [vmem:[%s148 + $0x340] sm:$0xff]
                %255 = vst [vmem:[%s149 + $0x1a0] sm:$0xff] %v254
                %v256 = vld [vmem:[%s148 + $0x348] sm:$0xff]
                %257 = vst [vmem:[%s149 + $0x1a8] sm:$0xff] %v256
                %v258 = vld [vmem:[%s148 + $0x360] sm:$0xff]
                %259 = vst [vmem:[%s149 + $0x1b0] sm:$0xff] %v258
                %v260 = vld [vmem:[%s148 + $0x368] sm:$0xff]
                %261 = vst [vmem:[%s149 + $0x1b8] sm:$0xff] %v260
                %v262 = vld [vmem:[%s148 + $0x380] sm:$0xff]
                %263 = vst [vmem:[%s149 + $0x1c0] sm:$0xff] %v262
                %v264 = vld [vmem:[%s148 + $0x388] sm:$0xff]
                %265 = vst [vmem:[%s149 + $0x1c8] sm:$0xff] %v264
                %v266 = vld [vmem:[%s148 + $0x3a0] sm:$0xff]
                %267 = vst [vmem:[%s149 + $0x1d0] sm:$0xff] %v266
                %v268 = vld [vmem:[%s148 + $0x3a8] sm:$0xff]
                %269 = vst [vmem:[%s149 + $0x1d8] sm:$0xff] %v268
                %v270 = vld [vmem:[%s148 + $0x3c0] sm:$0xff]
                %271 = vst [vmem:[%s149 + $0x1e0] sm:$0xff] %v270
                %v272 = vld [vmem:[%s148 + $0x3c8] sm:$0xff]
                %273 = vst [vmem:[%s149 + $0x1e8] sm:$0xff] %v272
                %v274 = vld [vmem:[%s148 + $0x3e0] sm:$0xff]
                %275 = vst [vmem:[%s149 + $0x1f0] sm:$0xff] %v274
                %v276 = vld [vmem:[%s148 + $0x3e8] sm:$0xff]
                %277 = vst [vmem:[%s149 + $0x1f8] sm:$0xff] %v276
              $region41: #{model_forward.2} parent=35 // loop_footer
                %s147 = sadd.s32 1, %s143
              $region42: #{model_forward.2} parent=35 // loop_footer_branch
                %142 = sbr.rel target = $region38
              $region43: #{model_forward.2} parent=35 // loop_exit
                _
            $region36: #{model_forward.2} parent=31 // pred_fallthru
              _
            // Predicated region
            $region44: #{model_forward.2} parent=31 // pred_check
              _
            $region45: #{model_forward.2} parent=31 // pred_check_branch
              %279 = sbr.rel target = $region47
            $region46: #{model_forward.2} parent=31 // pred_region
              _
            $region47: #{model_forward.2} parent=31 // pred_fallthru
              _
          $region32: #{model_forward.2} parent=27 // pred_fallthru
            _
          %280 = vnop
        $region28: #{model_forward.2} parent=23 // pred_fallthru
          _
      $region24: #{model_forward.2} parent=5 // pred_fallthru
        _
      %p281 = scmp.le.s32.totalorder 1, %s9
      %p282 = scmp.lt.s32.totalorder %s9, 3
      %p283 = pnand %p281, %p282
      %p284 = pneg %p283
      // Predicated region
      $region48: #{model_forward.2} parent=5 // pred_check
        _
      $region49: #{model_forward.2} parent=5 // pred_check_branch
        %286 = sbr.rel (%p283) target = $region51
      $region50: #{model_forward.2} parent=5 // pred_region
        %s287 = ssub.s32 %s9, 1
        %s288 = sand.u32 %s43, 1
        %s289 = sand.u32 %s43, 1
        %s290 = smul.addr %s289, 512
        %s291 = scalar_lea.vmem [#allocation2], %s290
        // Predicated region
        $region52: #{model_forward.2} parent=50 // pred_check
          %p292 = pneg %p56
        $region53: #{model_forward.2} parent=50 // pred_check_branch
          %294 = sbr.rel (%p292) target = $region55
        $region54: #{model_forward.2} parent=50 // pred_region
          _
        $region55: #{model_forward.2} parent=50 // pred_fallthru
          _
        %p295 = pneg %p30
        %p296 = pneg %p27
        %s297 = sand.u32 %s43, 1
        %s298 = sand.u32 %s43, 1
        %s299 = smul.addr %s298, 512
        %s300 = scalar_lea.vmem [#allocation2], %s299
        %p301 = pneg %p56
        %p302 = pneg %p53
        %p303 = pneg %p77
        %p304 = pneg %p74
        %p305 = pneg %p103
        %p306 = pneg %p100
        %s307 = sand.u32 %s90, 1
        %s308 = sand.u32 %s90, 1
        %s309 = smul.addr %s308, 64
        %s310 = scalar_lea.vmem [#allocation3], %s309
        %s311 = smul.u32 4, %s14
        %s312 = smul.u32 4, %s14
        %v313 = vld [vmem:[%s0] sm:$0xff]
        %v314 = vld [vmem:[%s0 + $0x8] sm:$0xff]
        %v315 = vld [vmem:[%s291] sm:$0xff]
        %v316 = vld [vmem:[%s291 + $0x8] sm:$0xff]
        %v317 = vld [vmem:[%s291 + $0x10] sm:$0xff]
        %v318 = vld [vmem:[%s291 + $0x18] sm:$0xff]
        %v319 = vld [vmem:[%s291 + $0x20] sm:$0xff]
        %v320 = vld [vmem:[%s291 + $0x28] sm:$0xff]
        %v321 = vld [vmem:[%s291 + $0x30] sm:$0xff]
        %v322 = vld [vmem:[%s291 + $0x38] sm:$0xff]
        %v323 = vld [vmem:[%s291 + $0x40] sm:$0xff]
        %v324 = vld [vmem:[%s291 + $0x48] sm:$0xff]
        %v325 = vld [vmem:[%s291 + $0x50] sm:$0xff]
        %v326 = vld [vmem:[%s291 + $0x58] sm:$0xff]
        %v327 = vld [vmem:[%s291 + $0x60] sm:$0xff]
        %v328 = vld [vmem:[%s291 + $0x68] sm:$0xff]
        %v329 = vld [vmem:[%s291 + $0x70] sm:$0xff]
        %v330 = vld [vmem:[%s291 + $0x78] sm:$0xff]
        %v331 = vld [vmem:[%s291 + $0x80] sm:$0xff]
        %v332 = vld [vmem:[%s291 + $0x88] sm:$0xff]
        %v333 = vld [vmem:[%s291 + $0x90] sm:$0xff]
        %v334 = vld [vmem:[%s291 + $0x98] sm:$0xff]
        %v335 = vld [vmem:[%s291 + $0xa0] sm:$0xff]
        %v336 = vld [vmem:[%s291 + $0xa8] sm:$0xff]
        %v337 = vld [vmem:[%s291 + $0xb0] sm:$0xff]
        %v338 = vld [vmem:[%s291 + $0xb8] sm:$0xff]
        %v339 = vld [vmem:[%s291 + $0xc0] sm:$0xff]
        %v340 = vld [vmem:[%s291 + $0xc8] sm:$0xff]
        %v341 = vld [vmem:[%s291 + $0xd0] sm:$0xff]
        %v342 = vld [vmem:[%s291 + $0xd8] sm:$0xff]
        %v343 = vld [vmem:[%s291 + $0xe0] sm:$0xff]
        %v344 = vld [vmem:[%s291 + $0xe8] sm:$0xff]
        %v345 = vld [vmem:[%s291 + $0xf0] sm:$0xff]
        %v346 = vld [vmem:[%s291 + $0xf8] sm:$0xff]
        %v347 = vld [vmem:[%s291 + $0x100] sm:$0xff]
        %v348 = vld [vmem:[%s291 + $0x108] sm:$0xff]
        %v349 = vld [vmem:[%s291 + $0x110] sm:$0xff]
        %v350 = vld [vmem:[%s291 + $0x118] sm:$0xff]
        %v351 = vld [vmem:[%s291 + $0x120] sm:$0xff]
        %v352 = vld [vmem:[%s291 + $0x128] sm:$0xff]
        %v353 = vld [vmem:[%s291 + $0x130] sm:$0xff]
        %v354 = vld [vmem:[%s291 + $0x138] sm:$0xff]
        %v355 = vld [vmem:[%s291 + $0x140] sm:$0xff]
        %v356 = vld [vmem:[%s291 + $0x148] sm:$0xff]
        %v357 = vld [vmem:[%s291 + $0x150] sm:$0xff]
        %v358 = vld [vmem:[%s291 + $0x158] sm:$0xff]
        %v359 = vld [vmem:[%s291 + $0x160] sm:$0xff]
        %v360 = vld [vmem:[%s291 + $0x168] sm:$0xff]
        %v361 = vld [vmem:[%s291 + $0x170] sm:$0xff]
        %v362 = vld [vmem:[%s291 + $0x178] sm:$0xff]
        %v363 = vld [vmem:[%s291 + $0x180] sm:$0xff]
        %v364 = vld [vmem:[%s291 + $0x188] sm:$0xff]
        %v365 = vld [vmem:[%s291 + $0x190] sm:$0xff]
        %v366 = vld [vmem:[%s291 + $0x198] sm:$0xff]
        %v367 = vld [vmem:[%s291 + $0x1a0] sm:$0xff]
        %v368 = vld [vmem:[%s291 + $0x1a8] sm:$0xff]
        %v369 = vld [vmem:[%s291 + $0x1b0] sm:$0xff]
        %v370 = vld [vmem:[%s291 + $0x1b8] sm:$0xff]
        %v371 = vld [vmem:[%s291 + $0x1c0] sm:$0xff]
        %v372 = vld [vmem:[%s291 + $0x1c8] sm:$0xff]
        %v373 = vld [vmem:[%s291 + $0x1d0] sm:$0xff]
        %v374 = vld [vmem:[%s291 + $0x1d8] sm:$0xff]
        %v375 = vld [vmem:[%s291 + $0x1e0] sm:$0xff]
        %v376 = vld [vmem:[%s291 + $0x1e8] sm:$0xff]
        %v377 = vld [vmem:[%s291 + $0x1f0] sm:$0xff]
        %v378 = vld [vmem:[%s291 + $0x1f8] sm:$0xff]
        %v379 = vld [vmem:[%s2] sm:$0xff]
        %v380 = vld [vmem:[%s2 + $0x8] sm:$0xff]
        %382 = vset.pattern.permute.xlu0 0
        %383 = vperm.xlu0 %382, %v379
        %v384 = vpop.permute.xlu0 %383
        %387 = vset.pattern.permute.xlu0 0
        %388 = vperm.xlu0 %387, %v380
        %v389 = vpop.permute.xlu0 %388
        %v393 = vunpack.c.l.b16 %v313
        %v394 = vunpack.c.h.b16 %v313
        %v395 = vunpack.c.l.b16 %v314
        %v396 = vunpack.c.h.b16 %v314
        %v397 = vpack.c.b16 %v395, %v393
        %v398 = vpack.c.b16 %v396, %v394
        %v465 = vunpack.c.l.b16 %v315
        %v466 = vunpack.c.h.b16 %v315
        %v467 = vunpack.c.l.b16 %v316
        %v468 = vunpack.c.h.b16 %v316
        %v469 = vunpack.c.l.b16 %v317
        %v470 = vunpack.c.h.b16 %v317
        %v471 = vunpack.c.l.b16 %v318
        %v472 = vunpack.c.h.b16 %v318
        %v473 = vunpack.c.l.b16 %v319
        %v474 = vunpack.c.h.b16 %v319
        %v475 = vunpack.c.l.b16 %v320
        %v476 = vunpack.c.h.b16 %v320
        %v477 = vunpack.c.l.b16 %v321
        %v478 = vunpack.c.h.b16 %v321
        %v479 = vunpack.c.l.b16 %v322
        %v480 = vunpack.c.h.b16 %v322
        %v481 = vunpack.c.l.b16 %v323
        %v482 = vunpack.c.h.b16 %v323
        %v483 = vunpack.c.l.b16 %v324
        %v484 = vunpack.c.h.b16 %v324
        %v485 = vunpack.c.l.b16 %v325
        %v486 = vunpack.c.h.b16 %v325
        %v487 = vunpack.c.l.b16 %v326
        %v488 = vunpack.c.h.b16 %v326
        %v489 = vunpack.c.l.b16 %v327
        %v490 = vunpack.c.h.b16 %v327
        %v491 = vunpack.c.l.b16 %v328
        %v492 = vunpack.c.h.b16 %v328
        %v493 = vunpack.c.l.b16 %v329
        %v494 = vunpack.c.h.b16 %v329
        %v495 = vunpack.c.l.b16 %v330
        %v496 = vunpack.c.h.b16 %v330
        %v497 = vunpack.c.l.b16 %v331
        %v498 = vunpack.c.h.b16 %v331
        %v499 = vunpack.c.l.b16 %v332
        %v500 = vunpack.c.h.b16 %v332
        %v501 = vunpack.c.l.b16 %v333
        %v502 = vunpack.c.h.b16 %v333
        %v503 = vunpack.c.l.b16 %v334
        %v504 = vunpack.c.h.b16 %v334
        %v505 = vunpack.c.l.b16 %v335
        %v506 = vunpack.c.h.b16 %v335
        %v507 = vunpack.c.l.b16 %v336
        %v508 = vunpack.c.h.b16 %v336
        %v509 = vunpack.c.l.b16 %v337
        %v510 = vunpack.c.h.b16 %v337
        %v511 = vunpack.c.l.b16 %v338
        %v512 = vunpack.c.h.b16 %v338
        %v513 = vunpack.c.l.b16 %v339
        %v514 = vunpack.c.h.b16 %v339
        %v515 = vunpack.c.l.b16 %v340
        %v516 = vunpack.c.h.b16 %v340
        %v517 = vunpack.c.l.b16 %v341
        %v518 = vunpack.c.h.b16 %v341
        %v519 = vunpack.c.l.b16 %v342
        %v520 = vunpack.c.h.b16 %v342
        %v521 = vunpack.c.l.b16 %v343
        %v522 = vunpack.c.h.b16 %v343
        %v523 = vunpack.c.l.b16 %v344
        %v524 = vunpack.c.h.b16 %v344
        %v525 = vunpack.c.l.b16 %v345
        %v526 = vunpack.c.h.b16 %v345
        %v527 = vunpack.c.l.b16 %v346
        %v528 = vunpack.c.h.b16 %v346
        %v529 = vunpack.c.l.b16 %v347
        %v530 = vunpack.c.h.b16 %v347
        %v531 = vunpack.c.l.b16 %v348
        %v532 = vunpack.c.h.b16 %v348
        %v533 = vunpack.c.l.b16 %v349
        %v534 = vunpack.c.h.b16 %v349
        %v535 = vunpack.c.l.b16 %v350
        %v536 = vunpack.c.h.b16 %v350
        %v537 = vunpack.c.l.b16 %v351
        %v538 = vunpack.c.h.b16 %v351
        %v539 = vunpack.c.l.b16 %v352
        %v540 = vunpack.c.h.b16 %v352
        %v541 = vunpack.c.l.b16 %v353
        %v542 = vunpack.c.h.b16 %v353
        %v543 = vunpack.c.l.b16 %v354
        %v544 = vunpack.c.h.b16 %v354
        %v545 = vunpack.c.l.b16 %v355
        %v546 = vunpack.c.h.b16 %v355
        %v547 = vunpack.c.l.b16 %v356
        %v548 = vunpack.c.h.b16 %v356
        %v549 = vunpack.c.l.b16 %v357
        %v550 = vunpack.c.h.b16 %v357
        %v551 = vunpack.c.l.b16 %v358
        %v552 = vunpack.c.h.b16 %v358
        %v553 = vunpack.c.l.b16 %v359
        %v554 = vunpack.c.h.b16 %v359
        %v555 = vunpack.c.l.b16 %v360
        %v556 = vunpack.c.h.b16 %v360
        %v557 = vunpack.c.l.b16 %v361
        %v558 = vunpack.c.h.b16 %v361
        %v559 = vunpack.c.l.b16 %v362
        %v560 = vunpack.c.h.b16 %v362
        %v561 = vunpack.c.l.b16 %v363
        %v562 = vunpack.c.h.b16 %v363
        %v563 = vunpack.c.l.b16 %v364
        %v564 = vunpack.c.h.b16 %v364
        %v565 = vunpack.c.l.b16 %v365
        %v566 = vunpack.c.h.b16 %v365
        %v567 = vunpack.c.l.b16 %v366
        %v568 = vunpack.c.h.b16 %v366
        %v569 = vunpack.c.l.b16 %v367
        %v570 = vunpack.c.h.b16 %v367
        %v571 = vunpack.c.l.b16 %v368
        %v572 = vunpack.c.h.b16 %v368
        %v573 = vunpack.c.l.b16 %v369
        %v574 = vunpack.c.h.b16 %v369
        %v575 = vunpack.c.l.b16 %v370
        %v576 = vunpack.c.h.b16 %v370
        %v577 = vunpack.c.l.b16 %v371
        %v578 = vunpack.c.h.b16 %v371
        %v579 = vunpack.c.l.b16 %v372
        %v580 = vunpack.c.h.b16 %v372
        %v581 = vunpack.c.l.b16 %v373
        %v582 = vunpack.c.h.b16 %v373
        %v583 = vunpack.c.l.b16 %v374
        %v584 = vunpack.c.h.b16 %v374
        %v585 = vunpack.c.l.b16 %v375
        %v586 = vunpack.c.h.b16 %v375
        %v587 = vunpack.c.l.b16 %v376
        %v588 = vunpack.c.h.b16 %v376
        %v589 = vunpack.c.l.b16 %v377
        %v590 = vunpack.c.h.b16 %v377
        %v591 = vunpack.c.l.b16 %v378
        %v592 = vunpack.c.h.b16 %v378
        %v593 = vpack.c.b16 %v469, %v465
        %v594 = vpack.c.b16 %v470, %v466
        %v595 = vpack.c.b16 %v471, %v467
        %v596 = vpack.c.b16 %v472, %v468
        %v597 = vpack.c.b16 %v477, %v473
        %v598 = vpack.c.b16 %v478, %v474
        %v599 = vpack.c.b16 %v479, %v475
        %v600 = vpack.c.b16 %v480, %v476
        %v601 = vpack.c.b16 %v485, %v481
        %v602 = vpack.c.b16 %v486, %v482
        %v603 = vpack.c.b16 %v487, %v483
        %v604 = vpack.c.b16 %v488, %v484
        %v605 = vpack.c.b16 %v493, %v489
        %v606 = vpack.c.b16 %v494, %v490
        %v607 = vpack.c.b16 %v495, %v491
        %v608 = vpack.c.b16 %v496, %v492
        %v609 = vpack.c.b16 %v501, %v497
        %v610 = vpack.c.b16 %v502, %v498
        %v611 = vpack.c.b16 %v503, %v499
        %v612 = vpack.c.b16 %v504, %v500
        %v613 = vpack.c.b16 %v509, %v505
        %v614 = vpack.c.b16 %v510, %v506
        %v615 = vpack.c.b16 %v511, %v507
        %v616 = vpack.c.b16 %v512, %v508
        %v617 = vpack.c.b16 %v517, %v513
        %v618 = vpack.c.b16 %v518, %v514
        %v619 = vpack.c.b16 %v519, %v515
        %v620 = vpack.c.b16 %v520, %v516
        %v621 = vpack.c.b16 %v525, %v521
        %v622 = vpack.c.b16 %v526, %v522
        %v623 = vpack.c.b16 %v527, %v523
        %v624 = vpack.c.b16 %v528, %v524
        %v625 = vpack.c.b16 %v533, %v529
        %v626 = vpack.c.b16 %v534, %v530
        %v627 = vpack.c.b16 %v535, %v531
        %v628 = vpack.c.b16 %v536, %v532
        %v629 = vpack.c.b16 %v541, %v537
        %v630 = vpack.c.b16 %v542, %v538
        %v631 = vpack.c.b16 %v543, %v539
        %v632 = vpack.c.b16 %v544, %v540
        %v633 = vpack.c.b16 %v549, %v545
        %v634 = vpack.c.b16 %v550, %v546
        %v635 = vpack.c.b16 %v551, %v547
        %v636 = vpack.c.b16 %v552, %v548
        %v637 = vpack.c.b16 %v557, %v553
        %v638 = vpack.c.b16 %v558, %v554
        %v639 = vpack.c.b16 %v559, %v555
        %v640 = vpack.c.b16 %v560, %v556
        %v641 = vpack.c.b16 %v565, %v561
        %v642 = vpack.c.b16 %v566, %v562
        %v643 = vpack.c.b16 %v567, %v563
        %v644 = vpack.c.b16 %v568, %v564
        %v645 = vpack.c.b16 %v573, %v569
        %v646 = vpack.c.b16 %v574, %v570
        %v647 = vpack.c.b16 %v575, %v571
        %v648 = vpack.c.b16 %v576, %v572
        %v649 = vpack.c.b16 %v581, %v577
        %v650 = vpack.c.b16 %v582, %v578
        %v651 = vpack.c.b16 %v583, %v579
        %v652 = vpack.c.b16 %v584, %v580
        %v653 = vpack.c.b16 %v589, %v585
        %v654 = vpack.c.b16 %v590, %v586
        %v655 = vpack.c.b16 %v591, %v587
        %v656 = vpack.c.b16 %v592, %v588
        %721 = vmatprep.subr.bf16.mxu0 %v594
        %722 = vmatpush1.bf16.msra.mxu0 %v593
        %723 = vmatprep.subr.bf16.mxu0 %v598
        %724 = vmatpush1.bf16.msra.mxu0 %v597
        %725 = vmatprep.subr.bf16.mxu0 %v602
        %726 = vmatpush1.bf16.msra.mxu0 %v601
        %727 = vmatprep.subr.bf16.mxu0 %v606
        %728 = vmatpush1.bf16.msra.mxu0 %v605
        %729 = vmatprep.subr.bf16.mxu0 %v610
        %730 = vmatpush1.bf16.msra.mxu0 %v609
        %731 = vmatprep.subr.bf16.mxu0 %v614
        %732 = vmatpush1.bf16.msra.mxu0 %v613
        %733 = vmatprep.subr.bf16.mxu0 %v618
        %734 = vmatpush1.bf16.msra.mxu0 %v617
        %735 = vmatprep.subr.bf16.mxu0 %v622
        %736 = vmatpush1.bf16.msra.mxu0 %v621
        %737 = vmatprep.subr.bf16.mxu0 %v626
        %738 = vmatpush1.bf16.msra.mxu0 %v625
        %739 = vmatprep.subr.bf16.mxu0 %v630
        %740 = vmatpush1.bf16.msra.mxu0 %v629
        %741 = vmatprep.subr.bf16.mxu0 %v634
        %742 = vmatpush1.bf16.msra.mxu0 %v633
        %743 = vmatprep.subr.bf16.mxu0 %v638
        %744 = vmatpush1.bf16.msra.mxu0 %v637
        %745 = vmatprep.subr.bf16.mxu0 %v642
        %746 = vmatpush1.bf16.msra.mxu0 %v641
        %747 = vmatprep.subr.bf16.mxu0 %v646
        %748 = vmatpush1.bf16.msra.mxu0 %v645
        %749 = vmatprep.subr.bf16.mxu0 %v650
        %750 = vmatpush1.bf16.msra.mxu0 %v649
        %751 = vmatprep.subr.bf16.mxu0 %v654
        %752 = vmatpush1.bf16.msra.mxu0 %v653
        %753 = vmatprep.mubr.bf16.mxu0 %v398
        %754 = vmatmul.mubr.bf16.gmra.mrb[0].mxu0 %v397
        %v755 = vpop.f32.mrb[0].mxu0
        %v756 = vadd.f32 %v384, %v755
        %v757 = vpop.f32.mrb[0].mxu0
        %v758 = vadd.f32 %v384, %v757
        %v759 = vpop.f32.mrb[0].mxu0
        %v760 = vadd.f32 %v389, %v759
        %v761 = vpop.f32.mrb[0].mxu0
        %v762 = vadd.f32 %v389, %v761
        %763 = vdwg.mxu0
        %764 = vmatprep.subr.bf16.mxu0 %v596
        %765 = vmatpush1.bf16.msra.mxu0 %v595
        %766 = vmatprep.subr.bf16.mxu0 %v600
        %767 = vmatpush1.bf16.msra.mxu0 %v599
        %768 = vmatprep.subr.bf16.mxu0 %v604
        %769 = vmatpush1.bf16.msra.mxu0 %v603
        %770 = vmatprep.subr.bf16.mxu0 %v608
        %771 = vmatpush1.bf16.msra.mxu0 %v607
        %772 = vmatprep.subr.bf16.mxu0 %v612
        %773 = vmatpush1.bf16.msra.mxu0 %v611
        %774 = vmatprep.subr.bf16.mxu0 %v616
        %775 = vmatpush1.bf16.msra.mxu0 %v615
        %776 = vmatprep.subr.bf16.mxu0 %v620
        %777 = vmatpush1.bf16.msra.mxu0 %v619
        %778 = vmatprep.subr.bf16.mxu0 %v624
        %779 = vmatpush1.bf16.msra.mxu0 %v623
        %780 = vmatprep.subr.bf16.mxu0 %v628
        %781 = vmatpush1.bf16.msra.mxu0 %v627
        %782 = vmatprep.subr.bf16.mxu0 %v632
        %783 = vmatpush1.bf16.msra.mxu0 %v631
        %784 = vmatprep.subr.bf16.mxu0 %v636
        %785 = vmatpush1.bf16.msra.mxu0 %v635
        %786 = vmatprep.subr.bf16.mxu0 %v640
        %787 = vmatpush1.bf16.msra.mxu0 %v639
        %788 = vmatprep.subr.bf16.mxu0 %v644
        %789 = vmatpush1.bf16.msra.mxu0 %v643
        %790 = vmatprep.subr.bf16.mxu0 %v648
        %791 = vmatpush1.bf16.msra.mxu0 %v647
        %792 = vmatprep.subr.bf16.mxu0 %v652
        %793 = vmatpush1.bf16.msra.mxu0 %v651
        %794 = vmatprep.subr.bf16.mxu0 %v656
        %795 = vmatpush1.bf16.msra.mxu0 %v655
        %796 = vmatprep.mubr.bf16.mxu0 %v398
        %797 = vmatmul.mubr.bf16.gmra.mrb[0].mxu0 %v397
        %v798 = vpop.f32.mrb[0].mxu0
        %v799 = vadd.f32 %v384, %v798
        %v800 = vpop.f32.mrb[0].mxu0
        %v801 = vadd.f32 %v384, %v800
        %v802 = vpop.f32.mrb[0].mxu0
        %v803 = vadd.f32 %v389, %v802
        %v804 = vpop.f32.mrb[0].mxu0
        %v805 = vadd.f32 %v389, %v804
        %806 = vdwg.mxu0
        %v807 = vadd.f32 %v756, 3.0
        %v808 = vadd.f32 %v758, 3.0
        %v809 = vadd.f32 %v799, 3.0
        %v810 = vadd.f32 %v801, 3.0
        %v811 = vadd.f32 %v760, 3.0
        %v812 = vadd.f32 %v762, 3.0
        %v813 = vadd.f32 %v803, 3.0
        %v814 = vadd.f32 %v805, 3.0
        %v815 = vmax.f32 %v807, 0.0
        %v816 = vmax.f32 %v808, 0.0
        %v817 = vmax.f32 %v809, 0.0
        %v818 = vmax.f32 %v810, 0.0
        %v819 = vmax.f32 %v811, 0.0
        %v820 = vmax.f32 %v812, 0.0
        %v821 = vmax.f32 %v813, 0.0
        %v822 = vmax.f32 %v814, 0.0
        %v823 = vmin.f32 %v815, 6.0
        %v824 = vmin.f32 %v816, 6.0
        %v825 = vmin.f32 %v817, 6.0
        %v826 = vmin.f32 %v818, 6.0
        %v827 = vmin.f32 %v819, 6.0
        %v828 = vmin.f32 %v820, 6.0
        %v829 = vmin.f32 %v821, 6.0
        %v830 = vmin.f32 %v822, 6.0
        %v831 = vmul.f32 %v756, %v823
        %v832 = vmul.f32 %v758, %v824
        %v833 = vmul.f32 %v799, %v825
        %v834 = vmul.f32 %v801, %v826
        %v835 = vmul.f32 %v760, %v827
        %v836 = vmul.f32 %v762, %v828
        %v837 = vmul.f32 %v803, %v829
        %v838 = vmul.f32 %v805, %v830
        %v839 = vmul.f32 %v831, 0.16666667
        %v840 = vmul.f32 %v832, 0.16666667
        %v841 = vmul.f32 %v833, 0.16666667
        %v842 = vmul.f32 %v834, 0.16666667
        %v843 = vmul.f32 %v835, 0.16666667
        %v844 = vmul.f32 %v836, 0.16666667
        %v845 = vmul.f32 %v837, 0.16666667
        %v846 = vmul.f32 %v838, 0.16666667
        %847 = vst [vmem:[%s310] sm:$0xff] %v839
        %848 = vst [vmem:[%s310 + $0x8] sm:$0xff] %v840
        %849 = vst [vmem:[%s310 + $0x10] sm:$0xff] %v841
        %850 = vst [vmem:[%s310 + $0x18] sm:$0xff] %v842
        %851 = vst [vmem:[%s310 + $0x20] sm:$0xff] %v843
        %852 = vst [vmem:[%s310 + $0x28] sm:$0xff] %v844
        %853 = vst [vmem:[%s310 + $0x30] sm:$0xff] %v845
        %854 = vst [vmem:[%s310 + $0x38] sm:$0xff] %v846
        %s855 = sand.u32 %s90, 1
        %s856 = sand.u32 %s90, 1
        %s857 = smul.addr %s856, 64
        %s858 = scalar_lea.vmem [#allocation3], %s857
        // Predicated region
        $region56: #{model_forward.2} parent=50 // pred_check
          %p859 = pneg %p100
        $region57: #{model_forward.2} parent=50 // pred_check_branch
          %861 = sbr.rel (%p859) target = $region59
        $region58: #{model_forward.2} parent=50 // pred_region
          %s862 = smul.u32 4, %s14
          %s863 = smul.addr %s862, 8
          %s864 = scalar_lea.vmem %s3, %s863
          // Predicated region
          $region60: #{model_forward.2} parent=58 // pred_check
            _
          $region61: #{model_forward.2} parent=58 // pred_check_branch
            %866 = sbr.rel (0) target = $region63
          $region62: #{model_forward.2} parent=58 // pred_region
            // Predicated region
            $region64: #{model_forward.2} parent=62 // pred_check
              _
            $region65: #{model_forward.2} parent=62 // pred_check_branch
              %868 = sbr.rel (0) target = $region67
            $region66: #{model_forward.2} parent=62 // pred_region
              loop: start=0, step=1, limit=1
              $region68: #{model_forward.2} parent=66 // loop_pre_header
                _
              $region69: #{model_forward.2} parent=66 // loop_header
                %s870 = sphi 0, %s874
                %p871 = scmp.ge.s32.totalorder %s870, 1
                %s875 = sphi %s858, %s858
                %s876 = sphi %s864, %s864
              $region70: #{model_forward.2} parent=66 // loop_header_branch
                %873 = sbr.rel (%p871) target = $region74
              $region71: #{model_forward.2} parent=66 // loop_body
                %v877 = vld [vmem:[%s875] sm:$0xff]
                %878 = vst [vmem:[%s876] sm:$0xff] %v877
                %v879 = vld [vmem:[%s875 + $0x8] sm:$0xff]
                %880 = vst [vmem:[%s876 + $0x8] sm:$0xff] %v879
                %v881 = vld [vmem:[%s875 + $0x10] sm:$0xff]
                %882 = vst [vmem:[%s876 + $0x10] sm:$0xff] %v881
                %v883 = vld [vmem:[%s875 + $0x18] sm:$0xff]
                %884 = vst [vmem:[%s876 + $0x18] sm:$0xff] %v883
                %v885 = vld [vmem:[%s875 + $0x20] sm:$0xff]
                %886 = vst [vmem:[%s876 + $0x40] sm:$0xff] %v885
                %v887 = vld [vmem:[%s875 + $0x28] sm:$0xff]
                %888 = vst [vmem:[%s876 + $0x48] sm:$0xff] %v887
                %v889 = vld [vmem:[%s875 + $0x30] sm:$0xff]
                %890 = vst [vmem:[%s876 + $0x50] sm:$0xff] %v889
                %v891 = vld [vmem:[%s875 + $0x38] sm:$0xff]
                %892 = vst [vmem:[%s876 + $0x58] sm:$0xff] %v891
              $region72: #{model_forward.2} parent=66 // loop_footer
                %s874 = sadd.s32 1, %s870
              $region73: #{model_forward.2} parent=66 // loop_footer_branch
                %869 = sbr.rel target = $region69
              $region74: #{model_forward.2} parent=66 // loop_exit
                _
            $region67: #{model_forward.2} parent=62 // pred_fallthru
              _
            // Predicated region
            $region75: #{model_forward.2} parent=62 // pred_check
              _
            $region76: #{model_forward.2} parent=62 // pred_check_branch
              %894 = sbr.rel target = $region78
            $region77: #{model_forward.2} parent=62 // pred_region
              _
            $region78: #{model_forward.2} parent=62 // pred_fallthru
              _
          $region63: #{model_forward.2} parent=58 // pred_fallthru
            _
          %895 = vnop
        $region59: #{model_forward.2} parent=50 // pred_fallthru
          _
      $region51: #{model_forward.2} parent=5 // pred_fallthru
        _
      %p896 = scmp.le.s32.totalorder 2, %s9
      // Predicated region
      $region79: #{model_forward.2} parent=5 // pred_check
        %p897 = pneg %p896
      $region80: #{model_forward.2} parent=5 // pred_check_branch
        %899 = sbr.rel (%p897) target = $region82
      $region81: #{model_forward.2} parent=5 // pred_region
        %s900 = ssub.s32 %s9, 2
        // Predicated region
        $region83: #{model_forward.2} parent=81 // pred_check
          %p901 = pneg %p106
        $region84: #{model_forward.2} parent=81 // pred_check_branch
          %903 = sbr.rel (%p901) target = $region86
        $region85: #{model_forward.2} parent=81 // pred_region
          %s904 = sand.u32 %s91, 1
          %s905 = sand.u32 %s91, 1
          %s906 = smul.addr %s905, 64
          %s907 = scalar_lea.vmem [#allocation3], %s906
        $region86: #{model_forward.2} parent=81 // pred_fallthru
          _
      $region82: #{model_forward.2} parent=5 // pred_fallthru
        _
    $region6: #{model_forward.2} parent=1 // loop_footer
      %s13 = sadd.s32 1, %s9
    $region7: #{model_forward.2} parent=1 // loop_footer_branch
      %8 = sbr.rel target = $region3
    $region8: #{model_forward.2} parent=1 // loop_exit
      _

// kernel: model_forward.3
$region0: #{model_forward.3}
  #allocation0 [shape = 'u32[]', space=smem, size = 0x4, offset = 0x4, fixed_abs, tag = 'smem constant byte address 0x4 - core index']
  #allocation1 [shape = 'u32[144,128]{1,0:T(1,128)}', space=vmem, size = 0x12000, scoped, tag = 'internal scratch']
  %s0 = inlined_call_operand.vmem [shape: bf16[16,128], index: 0, kind: input, shape index: {}]
  %s1 = inlined_call_operand.vmem [shape: bf16[128,4608], index: 1, kind: input, shape index: {}]
  %s2 = inlined_call_operand.vmem [shape: f32[16,1], index: 2, kind: input, shape index: {}]
  %s3 = inlined_call_operand.vmem [shape: f32[16,4608], index: 3, kind: output, shape index: {}]
  %s4 = sld [smem:[#allocation0]]
  $region87: #{model_forward.3} parent=0
    _
  %s6 = ssub.s32 1, %s4
  %s7 = scalar_select 0, %s6, %s4
  $region1: #{model_forward.3} parent=0
    #allocation2 [shape = 'u8[262144]{0}', space=vmem, size = 0x40000, scoped, tag = 'input window, operand 1']
    #allocation3 [shape = 'u8[65536]{0}', space=vmem, size = 0x10000, scoped, tag = 'output window, operand 0']
    loop: start=0, step=1, limit=11
    $region2: #{model_forward.3} parent=1 // loop_pre_header
      _
    $region3: #{model_forward.3} parent=1 // loop_header
      %s9 = sphi 0, %s13
      %p10 = scmp.ge.s32.totalorder %s9, 11
      %s17 = sphi 0, %s17
      %s19 = sphi 0, %s17
      %s20 = sphi 0, %s19
      %s34 = sphi 0, %s20
      %s40 = sphi 0, %s42
      %s43 = sphi 0, %s40
      %s44 = sphi 0, %s43
      %s60 = sphi 0, %s44
      %s64 = sphi 0, %s64
      %s66 = sphi 0, %s64
      %s67 = sphi 0, %s66
      %s81 = sphi 0, %s67
      %s87 = sphi 0, %s89
      %s90 = sphi 0, %s87
      %s91 = sphi 0, %s90
      %s107 = sphi 0, %s91
    $region4: #{model_forward.3} parent=1 // loop_header_branch
      %12 = sbr.rel (%p10) target = $region8
    $region5: #{model_forward.3} parent=1 // loop_body
      %s14 = ssub.s32 %s9, 1
      %s15 = ssub.s32 %s9, 2
      %s16 = sadd.s32 %s9, 1
      %s18 = sadd.s32 %s17, 1
      %p21 = scmp.eq.s32.totalorder %s9, 8
      %p22 = scmp.ne.s32.totalorder %s17, %s19
      %p23 = scmp.eq.s32.totalorder %s9, 0
      %p24 = por %p22, %p23
      %p25 = scmp.ne.s32.totalorder %s17, %s19
      %p26 = scmp.eq.s32.totalorder %s14, 8
      %p27 = por %p25, %p26
      %p28 = scmp.ne.s32.totalorder %s19, %s20
      %p29 = scmp.eq.s32.totalorder %s14, 0
      %p30 = por %p28, %p29
      %p31 = scmp.ne.s32.totalorder %s19, %s20
      %p32 = scmp.eq.s32.totalorder %s15, 8
      %p33 = por %p31, %p32
      %p35 = scmp.ne.s32.totalorder %s20, %s34
      %p36 = scmp.eq.s32.totalorder %s15, 0
      %p37 = por %p35, %p36
      %s38 = ssub.s32 %s9, %s16
      %p39 = scmp.eq.s32.totalorder %s38, 0
      %s41 = sadd.s32 %s40, 1
      %s42 = scalar_select %p39, %s40, %s41
      %p45 = pneg %p39
      %p46 = scmp.eq.s32.totalorder %s9, 8
      %p47 = por %p45, %p46
      %p48 = scmp.ne.s32.totalorder %s40, %s43
      %p49 = scmp.eq.s32.totalorder %s9, 0
      %p50 = por %p48, %p49
      %p51 = scmp.ne.s32.totalorder %s40, %s43
      %p52 = scmp.eq.s32.totalorder %s14, 8
      %p53 = por %p51, %p52
      %p54 = scmp.ne.s32.totalorder %s43, %s44
      %p55 = scmp.eq.s32.totalorder %s14, 0
      %p56 = por %p54, %p55
      %p57 = scmp.ne.s32.totalorder %s43, %s44
      %p58 = scmp.eq.s32.totalorder %s15, 8
      %p59 = por %p57, %p58
      %p61 = scmp.ne.s32.totalorder %s44, %s60
      %p62 = scmp.eq.s32.totalorder %s15, 0
      %p63 = por %p61, %p62
      %s65 = sadd.s32 %s64, 1
      %p68 = scmp.eq.s32.totalorder %s9, 8
      %p69 = scmp.ne.s32.totalorder %s64, %s66
      %p70 = scmp.eq.s32.totalorder %s9, 0
      %p71 = por %p69, %p70
      %p72 = scmp.ne.s32.totalorder %s64, %s66
      %p73 = scmp.eq.s32.totalorder %s14, 8
      %p74 = por %p72, %p73
      %p75 = scmp.ne.s32.totalorder %s66, %s67
      %p76 = scmp.eq.s32.totalorder %s14, 0
      %p77 = por %p75, %p76
      %p78 = scmp.ne.s32.totalorder %s66, %s67
      %p79 = scmp.eq.s32.totalorder %s15, 8
      %p80 = por %p78, %p79
      %p82 = scmp.ne.s32.totalorder %s67, %s81
      %p83 = scmp.eq.s32.totalorder %s15, 0
      %p84 = por %p82, %p83
      %s85 = ssub.s32 %s9, %s16
      %p86 = scmp.eq.s32.totalorder %s85, 0
      %s88 = sadd.s32 %s87, 1
      %s89 = scalar_select %p86, %s87, %s88
      %p92 = pneg %p86
      %p93 = scmp.eq.s32.totalorder %s9, 8
      %p94 = por %p92, %p93
      %p95 = scmp.ne.s32.totalorder %s87, %s90
      %p96 = scmp.eq.s32.totalorder %s9, 0
      %p97 = por %p95, %p96
      %p98 = scmp.ne.s32.totalorder %s87, %s90
      %p99 = scmp.eq.s32.totalorder %s14, 8
      %p100 = por %p98, %p99
      %p101 = scmp.ne.s32.totalorder %s90, %s91
      %p102 = scmp.eq.s32.totalorder %s14, 0
      %p103 = por %p101, %p102
      %p104 = scmp.ne.s32.totalorder %s90, %s91
      %p105 = scmp.eq.s32.totalorder %s15, 8
      %p106 = por %p104, %p105
      %p108 = scmp.ne.s32.totalorder %s91, %s107
      %p109 = scmp.eq.s32.totalorder %s15, 0
      %p110 = por %p108, %p109
      %p111 = scmp.le.s32.totalorder 1, %s9
      %p112 = scmp.lt.s32.totalorder %s9, 10
      %p113 = pnand %p111, %p112
      %p114 = pneg %p113
      // Predicated region
      $region9: #{model_forward.3} parent=5 // pred_check
        _
      $region10: #{model_forward.3} parent=5 // pred_check_branch
        %116 = sbr.rel (%p113) target = $region12
      $region11: #{model_forward.3} parent=5 // pred_region
        %s117 = ssub.s32 %s9, 1
        // Predicated region
        $region13: #{model_forward.3} parent=11 // pred_check
          %p118 = pneg %p30
        $region14: #{model_forward.3} parent=11 // pred_check_branch
          %120 = sbr.rel (%p118) target = $region16
        $region15: #{model_forward.3} parent=11 // pred_region
          _
        $region16: #{model_forward.3} parent=11 // pred_fallthru
          _
        // Predicated region
        $region17: #{model_forward.3} parent=11 // pred_check
          %p121 = pneg %p77
        $region18: #{model_forward.3} parent=11 // pred_check_branch
          %123 = sbr.rel (%p121) target = $region20
        $region19: #{model_forward.3} parent=11 // pred_region
          _
        $region20: #{model_forward.3} parent=11 // pred_fallthru
          _
      $region12: #{model_forward.3} parent=5 // pred_fallthru
        _
      %p124 = scmp.lt.s32.totalorder %s9, 9
      // Predicated region
      $region21: #{model_forward.3} parent=5 // pred_check
        %p125 = pneg %p124
      $region22: #{model_forward.3} parent=5 // pred_check_branch
        %127 = sbr.rel (%p125) target = $region24
      $region23: #{model_forward.3} parent=5 // pred_region
        // Predicated region
        $region25: #{model_forward.3} parent=23 // pred_check
          %p128 = pneg %p50
        $region26: #{model_forward.3} parent=23 // pred_check_branch
          %130 = sbr.rel (%p128) target = $region28
        $region27: #{model_forward.3} parent=23 // pred_region
          %s131 = sand.u32 %s40, 1
          %s132 = sand.u32 %s40, 1
          %s133 = smul.addr %s132, 256
          %s134 = scalar_lea.vmem [#allocation2], %s133
          %s135 = smul.u32 4, %s9
          %s136 = smul.addr %s135, 4
          %s137 = scalar_lea.vmem %s1, %s136
          // Predicated region
          $region29: #{model_forward.3} parent=27 // pred_check
            _
          $region30: #{model_forward.3} parent=27 // pred_check_branch
            %139 = sbr.rel (0) target = $region32
          $region31: #{model_forward.3} parent=27 // pred_region
            // Predicated region
            $region33: #{model_forward.3} parent=31 // pred_check
              _
            $region34: #{model_forward.3} parent=31 // pred_check_branch
              %141 = sbr.rel (0) target = $region36
            $region35: #{model_forward.3} parent=31 // pred_region
              loop: start=0, step=1, limit=1
              $region37: #{model_forward.3} parent=35 // loop_pre_header
                _
              $region38: #{model_forward.3} parent=35 // loop_header
                %s143 = sphi 0, %s147
                %p144 = scmp.ge.s32.totalorder %s143, 1
                %s148 = sphi %s137, %s137
                %s149 = sphi %s134, %s134
              $region39: #{model_forward.3} parent=35 // loop_header_branch
                %146 = sbr.rel (%p144) target = $region43
              $region40: #{model_forward.3} parent=35 // loop_body
                %v150 = vld [vmem:[%s148] sm:$0xff]
                %151 = vst [vmem:[%s149] sm:$0xff] %v150
                %v152 = vld [vmem:[%s148 + $0x8] sm:$0xff]
                %153 = vst [vmem:[%s149 + $0x8] sm:$0xff] %v152
                %v154 = vld [vmem:[%s148 + $0x90] sm:$0xff]
                %155 = vst [vmem:[%s149 + $0x10] sm:$0xff] %v154
                %v156 = vld [vmem:[%s148 + $0x98] sm:$0xff]
                %157 = vst [vmem:[%s149 + $0x18] sm:$0xff] %v156
                %v158 = vld [vmem:[%s148 + $0x120] sm:$0xff]
                %159 = vst [vmem:[%s149 + $0x20] sm:$0xff] %v158
                %v160 = vld [vmem:[%s148 + $0x128] sm:$0xff]
                %161 = vst [vmem:[%s149 + $0x28] sm:$0xff] %v160
                %v162 = vld [vmem:[%s148 + $0x1b0] sm:$0xff]
                %163 = vst [vmem:[%s149 + $0x30] sm:$0xff] %v162
                %v164 = vld [vmem:[%s148 + $0x1b8] sm:$0xff]
                %165 = vst [vmem:[%s149 + $0x38] sm:$0xff] %v164
                %v166 = vld [vmem:[%s148 + $0x240] sm:$0xff]
                %167 = vst [vmem:[%s149 + $0x40] sm:$0xff] %v166
                %v168 = vld [vmem:[%s148 + $0x248] sm:$0xff]
                %169 = vst [vmem:[%s149 + $0x48] sm:$0xff] %v168
                %v170 = vld [vmem:[%s148 + $0x2d0] sm:$0xff]
                %171 = vst [vmem:[%s149 + $0x50] sm:$0xff] %v170
                %v172 = vld [vmem:[%s148 + $0x2d8] sm:$0xff]
                %173 = vst [vmem:[%s149 + $0x58] sm:$0xff] %v172
                %v174 = vld [vmem:[%s148 + $0x360] sm:$0xff]
                %175 = vst [vmem:[%s149 + $0x60] sm:$0xff] %v174
                %v176 = vld [vmem:[%s148 + $0x368] sm:$0xff]
                %177 = vst [vmem:[%s149 + $0x68] sm:$0xff] %v176
                %v178 = vld [vmem:[%s148 + $0x3f0] sm:$0xff]
                %179 = vst [vmem:[%s149 + $0x70] sm:$0xff] %v178
                %v180 = vld [vmem:[%s148 + $0x3f8] sm:$0xff]
                %181 = vst [vmem:[%s149 + $0x78] sm:$0xff] %v180
                %v182 = vld [vmem:[%s148 + $0x480] sm:$0xff]
                %183 = vst [vmem:[%s149 + $0x80] sm:$0xff] %v182
                %v184 = vld [vmem:[%s148 + $0x488] sm:$0xff]
                %185 = vst [vmem:[%s149 + $0x88] sm:$0xff] %v184
                %v186 = vld [vmem:[%s148 + $0x510] sm:$0xff]
                %187 = vst [vmem:[%s149 + $0x90] sm:$0xff] %v186
                %v188 = vld [vmem:[%s148 + $0x518] sm:$0xff]
                %189 = vst [vmem:[%s149 + $0x98] sm:$0xff] %v188
                %v190 = vld [vmem:[%s148 + $0x5a0] sm:$0xff]
                %191 = vst [vmem:[%s149 + $0xa0] sm:$0xff] %v190
                %v192 = vld [vmem:[%s148 + $0x5a8] sm:$0xff]
                %193 = vst [vmem:[%s149 + $0xa8] sm:$0xff] %v192
                %v194 = vld [vmem:[%s148 + $0x630] sm:$0xff]
                %195 = vst [vmem:[%s149 + $0xb0] sm:$0xff] %v194
                %v196 = vld [vmem:[%s148 + $0x638] sm:$0xff]
                %197 = vst [vmem:[%s149 + $0xb8] sm:$0xff] %v196
                %v198 = vld [vmem:[%s148 + $0x6c0] sm:$0xff]
                %199 = vst [vmem:[%s149 + $0xc0] sm:$0xff] %v198
                %v200 = vld [vmem:[%s148 + $0x6c8] sm:$0xff]
                %201 = vst [vmem:[%s149 + $0xc8] sm:$0xff] %v200
                %v202 = vld [vmem:[%s148 + $0x750] sm:$0xff]
                %203 = vst [vmem:[%s149 + $0xd0] sm:$0xff] %v202
                %v204 = vld [vmem:[%s148 + $0x758] sm:$0xff]
                %205 = vst [vmem:[%s149 + $0xd8] sm:$0xff] %v204
                %v206 = vld [vmem:[%s148 + $0x7e0] sm:$0xff]
                %207 = vst [vmem:[%s149 + $0xe0] sm:$0xff] %v206
                %v208 = vld [vmem:[%s148 + $0x7e8] sm:$0xff]
                %209 = vst [vmem:[%s149 + $0xe8] sm:$0xff] %v208
                %v210 = vld [vmem:[%s148 + $0x870] sm:$0xff]
                %211 = vst [vmem:[%s149 + $0xf0] sm:$0xff] %v210
                %v212 = vld [vmem:[%s148 + $0x878] sm:$0xff]
                %213 = vst [vmem:[%s149 + $0xf8] sm:$0xff] %v212
              $region41: #{model_forward.3} parent=35 // loop_footer
                %s147 = sadd.s32 1, %s143
              $region42: #{model_forward.3} parent=35 // loop_footer_branch
                %142 = sbr.rel target = $region38
              $region43: #{model_forward.3} parent=35 // loop_exit
                _
            $region36: #{model_forward.3} parent=31 // pred_fallthru
              _
            // Predicated region
            $region44: #{model_forward.3} parent=31 // pred_check
              _
            $region45: #{model_forward.3} parent=31 // pred_check_branch
              %215 = sbr.rel target = $region47
            $region46: #{model_forward.3} parent=31 // pred_region
              _
            $region47: #{model_forward.3} parent=31 // pred_fallthru
              _
          $region32: #{model_forward.3} parent=27 // pred_fallthru
            _
          %216 = vnop
        $region28: #{model_forward.3} parent=23 // pred_fallthru
          _
      $region24: #{model_forward.3} parent=5 // pred_fallthru
        _
      %p217 = scmp.le.s32.totalorder 1, %s9
      %p218 = scmp.lt.s32.totalorder %s9, 10
      %p219 = pnand %p217, %p218
      %p220 = pneg %p219
      // Predicated region
      $region48: #{model_forward.3} parent=5 // pred_check
        _
      $region49: #{model_forward.3} parent=5 // pred_check_branch
        %222 = sbr.rel (%p219) target = $region51
      $region50: #{model_forward.3} parent=5 // pred_region
        %s223 = ssub.s32 %s9, 1
        %s224 = sand.u32 %s43, 1
        %s225 = sand.u32 %s43, 1
        %s226 = smul.addr %s225, 256
        %s227 = scalar_lea.vmem [#allocation2], %s226
        // Predicated region
        $region52: #{model_forward.3} parent=50 // pred_check
          %p228 = pneg %p56
        $region53: #{model_forward.3} parent=50 // pred_check_branch
          %230 = sbr.rel (%p228) target = $region55
        $region54: #{model_forward.3} parent=50 // pred_region
          _
        $region55: #{model_forward.3} parent=50 // pred_fallthru
          _
        %p231 = pneg %p30
        %p232 = pneg %p27
        %s233 = sand.u32 %s43, 1
        %s234 = sand.u32 %s43, 1
        %s235 = smul.addr %s234, 256
        %s236 = scalar_lea.vmem [#allocation2], %s235
        %p237 = pneg %p56
        %p238 = pneg %p53
        %p239 = pneg %p77
        %p240 = pneg %p74
        %p241 = pneg %p103
        %p242 = pneg %p100
        %s243 = sand.u32 %s90, 1
        %s244 = sand.u32 %s90, 1
        %s245 = smul.addr %s244, 64
        %s246 = scalar_lea.vmem [#allocation3], %s245
        %s247 = smul.u32 4, %s14
        %s248 = smul.u32 4, %s14
        %v250 = vld [vmem:[%s0] sm:$0xf]
        %v251 = vld [vmem:[%s0 + $0x4] sm:$0xf]
        %v252 = vld [vmem:[%s227] sm:$0xff]
        %v253 = vld [vmem:[%s227 + $0x8] sm:$0xff]
        %v254 = vld [vmem:[%s227 + $0x10] sm:$0xff]
        %v255 = vld [vmem:[%s227 + $0x18] sm:$0xff]
        %v256 = vld [vmem:[%s227 + $0x20] sm:$0xff]
        %v257 = vld [vmem:[%s227 + $0x28] sm:$0xff]
        %v258 = vld [vmem:[%s227 + $0x30] sm:$0xff]
        %v259 = vld [vmem:[%s227 + $0x38] sm:$0xff]
        %v260 = vld [vmem:[%s227 + $0x40] sm:$0xff]
        %v261 = vld [vmem:[%s227 + $0x48] sm:$0xff]
        %v262 = vld [vmem:[%s227 + $0x50] sm:$0xff]
        %v263 = vld [vmem:[%s227 + $0x58] sm:$0xff]
        %v264 = vld [vmem:[%s227 + $0x60] sm:$0xff]
        %v265 = vld [vmem:[%s227 + $0x68] sm:$0xff]
        %v266 = vld [vmem:[%s227 + $0x70] sm:$0xff]
        %v267 = vld [vmem:[%s227 + $0x78] sm:$0xff]
        %v268 = vld [vmem:[%s227 + $0x80] sm:$0xff]
        %v269 = vld [vmem:[%s227 + $0x88] sm:$0xff]
        %v270 = vld [vmem:[%s227 + $0x90] sm:$0xff]
        %v271 = vld [vmem:[%s227 + $0x98] sm:$0xff]
        %v272 = vld [vmem:[%s227 + $0xa0] sm:$0xff]
        %v273 = vld [vmem:[%s227 + $0xa8] sm:$0xff]
        %v274 = vld [vmem:[%s227 + $0xb0] sm:$0xff]
        %v275 = vld [vmem:[%s227 + $0xb8] sm:$0xff]
        %v276 = vld [vmem:[%s227 + $0xc0] sm:$0xff]
        %v277 = vld [vmem:[%s227 + $0xc8] sm:$0xff]
        %v278 = vld [vmem:[%s227 + $0xd0] sm:$0xff]
        %v279 = vld [vmem:[%s227 + $0xd8] sm:$0xff]
        %v280 = vld [vmem:[%s227 + $0xe0] sm:$0xff]
        %v281 = vld [vmem:[%s227 + $0xe8] sm:$0xff]
        %v282 = vld [vmem:[%s227 + $0xf0] sm:$0xff]
        %v283 = vld [vmem:[%s227 + $0xf8] sm:$0xff]
        %v284 = vld [vmem:[%s2] sm:$0xff]
        %v285 = vld [vmem:[%s2 + $0x8] sm:$0xff]
        %287 = vset.pattern.permute.xlu0 0
        %288 = vperm.xlu0 %287, %v284
        %v289 = vpop.permute.xlu0 %288
        %292 = vset.pattern.permute.xlu0 0
        %293 = vperm.xlu0 %292, %v285
        %v294 = vpop.permute.xlu0 %293
        %v298 = vunpack.c.l.b16 %v250
        %v299 = vunpack.c.l.b16 %v251
        %v300 = vpack.c.b16 %v299, %v298
        %v334 = vunpack.c.l.b16 %v252
        %v335 = vunpack.c.h.b16 %v252
        %v336 = vunpack.c.l.b16 %v253
        %v337 = vunpack.c.h.b16 %v253
        %v338 = vunpack.c.l.b16 %v254
        %v339 = vunpack.c.h.b16 %v254
        %v340 = vunpack.c.l.b16 %v255
        %v341 = vunpack.c.h.b16 %v255
        %v342 = vunpack.c.l.b16 %v256
        %v343 = vunpack.c.h.b16 %v256
        %v344 = vunpack.c.l.b16 %v257
        %v345 = vunpack.c.h.b16 %v257
        %v346 = vunpack.c.l.b16 %v258
        %v347 = vunpack.c.h.b16 %v258
        %v348 = vunpack.c.l.b16 %v259
        %v349 = vunpack.c.h.b16 %v259
        %v350 = vunpack.c.l.b16 %v260
        %v351 = vunpack.c.h.b16 %v260
        %v352 = vunpack.c.l.b16 %v261
        %v353 = vunpack.c.h.b16 %v261
        %v354 = vunpack.c.l.b16 %v262
        %v355 = vunpack.c.h.b16 %v262
        %v356 = vunpack.c.l.b16 %v263
        %v357 = vunpack.c.h.b16 %v263
        %v358 = vunpack.c.l.b16 %v264
        %v359 = vunpack.c.h.b16 %v264
        %v360 = vunpack.c.l.b16 %v265
        %v361 = vunpack.c.h.b16 %v265
        %v362 = vunpack.c.l.b16 %v266
        %v363 = vunpack.c.h.b16 %v266
        %v364 = vunpack.c.l.b16 %v267
        %v365 = vunpack.c.h.b16 %v267
        %v366 = vunpack.c.l.b16 %v268
        %v367 = vunpack.c.h.b16 %v268
        %v368 = vunpack.c.l.b16 %v269
        %v369 = vunpack.c.h.b16 %v269
        %v370 = vunpack.c.l.b16 %v270
        %v371 = vunpack.c.h.b16 %v270
        %v372 = vunpack.c.l.b16 %v271
        %v373 = vunpack.c.h.b16 %v271
        %v374 = vunpack.c.l.b16 %v272
        %v375 = vunpack.c.h.b16 %v272
        %v376 = vunpack.c.l.b16 %v273
        %v377 = vunpack.c.h.b16 %v273
        %v378 = vunpack.c.l.b16 %v274
        %v379 = vunpack.c.h.b16 %v274
        %v380 = vunpack.c.l.b16 %v275
        %v381 = vunpack.c.h.b16 %v275
        %v382 = vunpack.c.l.b16 %v276
        %v383 = vunpack.c.h.b16 %v276
        %v384 = vunpack.c.l.b16 %v277
        %v385 = vunpack.c.h.b16 %v277
        %v386 = vunpack.c.l.b16 %v278
        %v387 = vunpack.c.h.b16 %v278
        %v388 = vunpack.c.l.b16 %v279
        %v389 = vunpack.c.h.b16 %v279
        %v390 = vunpack.c.l.b16 %v280
        %v391 = vunpack.c.h.b16 %v280
        %v392 = vunpack.c.l.b16 %v281
        %v393 = vunpack.c.h.b16 %v281
        %v394 = vunpack.c.l.b16 %v282
        %v395 = vunpack.c.h.b16 %v282
        %v396 = vunpack.c.l.b16 %v283
        %v397 = vunpack.c.h.b16 %v283
        %v398 = vpack.c.b16 %v338, %v334
        %v399 = vpack.c.b16 %v339, %v335
        %v400 = vpack.c.b16 %v340, %v336
        %v401 = vpack.c.b16 %v341, %v337
        %v402 = vpack.c.b16 %v346, %v342
        %v403 = vpack.c.b16 %v347, %v343
        %v404 = vpack.c.b16 %v348, %v344
        %v405 = vpack.c.b16 %v349, %v345
        %v406 = vpack.c.b16 %v354, %v350
        %v407 = vpack.c.b16 %v355, %v351
        %v408 = vpack.c.b16 %v356, %v352
        %v409 = vpack.c.b16 %v357, %v353
        %v410 = vpack.c.b16 %v362, %v358
        %v411 = vpack.c.b16 %v363, %v359
        %v412 = vpack.c.b16 %v364, %v360
        %v413 = vpack.c.b16 %v365, %v361
        %v414 = vpack.c.b16 %v370, %v366
        %v415 = vpack.c.b16 %v371, %v367
        %v416 = vpack.c.b16 %v372, %v368
        %v417 = vpack.c.b16 %v373, %v369
        %v418 = vpack.c.b16 %v378, %v374
        %v419 = vpack.c.b16 %v379, %v375
        %v420 = vpack.c.b16 %v380, %v376
        %v421 = vpack.c.b16 %v381, %v377
        %v422 = vpack.c.b16 %v386, %v382
        %v423 = vpack.c.b16 %v387, %v383
        %v424 = vpack.c.b16 %v388, %v384
        %v425 = vpack.c.b16 %v389, %v385
        %v426 = vpack.c.b16 %v394, %v390
        %v427 = vpack.c.b16 %v395, %v391
        %v428 = vpack.c.b16 %v396, %v392
        %v429 = vpack.c.b16 %v397, %v393
        %462 = vmatprep.subr.bf16.mxu0 %v399
        %463 = vmatpush1.bf16.msra.mxu0 %v398
        %464 = vmatprep.subr.bf16.mxu0 %v403
        %465 = vmatpush1.bf16.msra.mxu0 %v402
        %466 = vmatprep.subr.bf16.mxu0 %v407
        %467 = vmatpush1.bf16.msra.mxu0 %v406
        %468 = vmatprep.subr.bf16.mxu0 %v411
        %469 = vmatpush1.bf16.msra.mxu0 %v410
        %470 = vmatprep.subr.bf16.mxu0 %v415
        %471 = vmatpush1.bf16.msra.mxu0 %v414
        %472 = vmatprep.subr.bf16.mxu0 %v419
        %473 = vmatpush1.bf16.msra.mxu0 %v418
        %474 = vmatprep.subr.bf16.mxu0 %v423
        %475 = vmatpush1.bf16.msra.mxu0 %v422
        %476 = vmatprep.subr.bf16.mxu0 %v427
        %477 = vmatpush1.bf16.msra.mxu0 %v426
        %478 = vmatprep.subr.bf16.mxu0 0
        %479 = vmatpush1.bf16.msra.mxu0 0
        %480 = vmatprep.subr.bf16.mxu0 0
        %481 = vmatpush1.bf16.msra.mxu0 0
        %482 = vmatprep.subr.bf16.mxu0 0
        %483 = vmatpush1.bf16.msra.mxu0 0
        %484 = vmatprep.subr.bf16.mxu0 0
        %485 = vmatpush1.bf16.msra.mxu0 0
        %486 = vmatprep.subr.bf16.mxu0 0
        %487 = vmatpush1.bf16.msra.mxu0 0
        %488 = vmatprep.subr.bf16.mxu0 0
        %489 = vmatpush1.bf16.msra.mxu0 0
        %490 = vmatprep.subr.bf16.mxu0 0
        %491 = vmatpush1.bf16.msra.mxu0 0
        %492 = vmatprep.subr.bf16.mxu0 0
        %493 = vmatpush1.bf16.msra.mxu0 0
        %494 = vmatprep.mubr.bf16.mxu0 0
        %495 = vmatmul.mubr.bf16.gmra.mrb[0].mxu0 %v300
        %v496 = vpop.f32.mrb[0].mxu0
        %v497 = vadd.f32 %v289, %v496
        %v498 = vpop.f32.mrb[0].mxu0
        %v499 = vadd.f32 %v289, %v498
        %v500 = vpop.f32.mrb[0].mxu0
        %v501 = vadd.f32 %v294, %v500
        %v502 = vpop.f32.mrb[0].mxu0
        %v503 = vadd.f32 %v294, %v502
        %504 = vdwg.mxu0
        %505 = vmatprep.subr.bf16.mxu0 %v401
        %506 = vmatpush1.bf16.msra.mxu0 %v400
        %507 = vmatprep.subr.bf16.mxu0 %v405
        %508 = vmatpush1.bf16.msra.mxu0 %v404
        %509 = vmatprep.subr.bf16.mxu0 %v409
        %510 = vmatpush1.bf16.msra.mxu0 %v408
        %511 = vmatprep.subr.bf16.mxu0 %v413
        %512 = vmatpush1.bf16.msra.mxu0 %v412
        %513 = vmatprep.subr.bf16.mxu0 %v417
        %514 = vmatpush1.bf16.msra.mxu0 %v416
        %515 = vmatprep.subr.bf16.mxu0 %v421
        %516 = vmatpush1.bf16.msra.mxu0 %v420
        %517 = vmatprep.subr.bf16.mxu0 %v425
        %518 = vmatpush1.bf16.msra.mxu0 %v424
        %519 = vmatprep.subr.bf16.mxu0 %v429
        %520 = vmatpush1.bf16.msra.mxu0 %v428
        %521 = vmatprep.subr.bf16.mxu0 0
        %522 = vmatpush1.bf16.msra.mxu0 0
        %523 = vmatprep.subr.bf16.mxu0 0
        %524 = vmatpush1.bf16.msra.mxu0 0
        %525 = vmatprep.subr.bf16.mxu0 0
        %526 = vmatpush1.bf16.msra.mxu0 0
        %527 = vmatprep.subr.bf16.mxu0 0
        %528 = vmatpush1.bf16.msra.mxu0 0
        %529 = vmatprep.subr.bf16.mxu0 0
        %530 = vmatpush1.bf16.msra.mxu0 0
        %531 = vmatprep.subr.bf16.mxu0 0
        %532 = vmatpush1.bf16.msra.mxu0 0
        %533 = vmatprep.subr.bf16.mxu0 0
        %534 = vmatpush1.bf16.msra.mxu0 0
        %535 = vmatprep.subr.bf16.mxu0 0
        %536 = vmatpush1.bf16.msra.mxu0 0
        %537 = vmatprep.mubr.bf16.mxu0 0
        %538 = vmatmul.mubr.bf16.gmra.mrb[0].mxu0 %v300
        %v539 = vpop.f32.mrb[0].mxu0
        %v540 = vadd.f32 %v289, %v539
        %v541 = vpop.f32.mrb[0].mxu0
        %v542 = vadd.f32 %v289, %v541
        %v543 = vpop.f32.mrb[0].mxu0
        %v544 = vadd.f32 %v294, %v543
        %v545 = vpop.f32.mrb[0].mxu0
        %v546 = vadd.f32 %v294, %v545
        %547 = vdwg.mxu0
        %v548 = vadd.f32 %v497, 3.0
        %v549 = vadd.f32 %v499, 3.0
        %v550 = vadd.f32 %v540, 3.0
        %v551 = vadd.f32 %v542, 3.0
        %v552 = vadd.f32 %v501, 3.0
        %v553 = vadd.f32 %v503, 3.0
        %v554 = vadd.f32 %v544, 3.0
        %v555 = vadd.f32 %v546, 3.0
        %v556 = vmax.f32 %v548, 0.0
        %v557 = vmax.f32 %v549, 0.0
        %v558 = vmax.f32 %v550, 0.0
        %v559 = vmax.f32 %v551, 0.0
        %v560 = vmax.f32 %v552, 0.0
        %v561 = vmax.f32 %v553, 0.0
        %v562 = vmax.f32 %v554, 0.0
        %v563 = vmax.f32 %v555, 0.0
        %v564 = vmin.f32 %v556, 6.0
        %v565 = vmin.f32 %v557, 6.0
        %v566 = vmin.f32 %v558, 6.0
        %v567 = vmin.f32 %v559, 6.0
        %v568 = vmin.f32 %v560, 6.0
        %v569 = vmin.f32 %v561, 6.0
        %v570 = vmin.f32 %v562, 6.0
        %v571 = vmin.f32 %v563, 6.0
        %v572 = vmul.f32 %v497, %v564
        %v573 = vmul.f32 %v499, %v565
        %v574 = vmul.f32 %v540, %v566
        %v575 = vmul.f32 %v542, %v567
        %v576 = vmul.f32 %v501, %v568
        %v577 = vmul.f32 %v503, %v569
        %v578 = vmul.f32 %v544, %v570
        %v579 = vmul.f32 %v546, %v571
        %v580 = vmul.f32 %v572, 0.16666667
        %v581 = vmul.f32 %v573, 0.16666667
        %v582 = vmul.f32 %v574, 0.16666667
        %v583 = vmul.f32 %v575, 0.16666667
        %v584 = vmul.f32 %v576, 0.16666667
        %v585 = vmul.f32 %v577, 0.16666667
        %v586 = vmul.f32 %v578, 0.16666667
        %v587 = vmul.f32 %v579, 0.16666667
        %588 = vst [vmem:[%s246] sm:$0xff] %v580
        %589 = vst [vmem:[%s246 + $0x8] sm:$0xff] %v581
        %590 = vst [vmem:[%s246 + $0x10] sm:$0xff] %v582
        %591 = vst [vmem:[%s246 + $0x18] sm:$0xff] %v583
        %592 = vst [vmem:[%s246 + $0x20] sm:$0xff] %v584
        %593 = vst [vmem:[%s246 + $0x28] sm:$0xff] %v585
        %594 = vst [vmem:[%s246 + $0x30] sm:$0xff] %v586
        %595 = vst [vmem:[%s246 + $0x38] sm:$0xff] %v587
        %s596 = sand.u32 %s90, 1
        %s597 = sand.u32 %s90, 1
        %s598 = smul.addr %s597, 64
        %s599 = scalar_lea.vmem [#allocation3], %s598
        // Predicated region
        $region56: #{model_forward.3} parent=50 // pred_check
          %p600 = pneg %p100
        $region57: #{model_forward.3} parent=50 // pred_check_branch
          %602 = sbr.rel (%p600) target = $region59
        $region58: #{model_forward.3} parent=50 // pred_region
          %s603 = smul.u32 4, %s14
          %s604 = smul.addr %s603, 8
          %s605 = scalar_lea.vmem %s3, %s604
          // Predicated region
          $region60: #{model_forward.3} parent=58 // pred_check
            _
          $region61: #{model_forward.3} parent=58 // pred_check_branch
            %607 = sbr.rel (0) target = $region63
          $region62: #{model_forward.3} parent=58 // pred_region
            // Predicated region
            $region64: #{model_forward.3} parent=62 // pred_check
              _
            $region65: #{model_forward.3} parent=62 // pred_check_branch
              %609 = sbr.rel (0) target = $region67
            $region66: #{model_forward.3} parent=62 // pred_region
              loop: start=0, step=1, limit=1
              $region68: #{model_forward.3} parent=66 // loop_pre_header
                _
              $region69: #{model_forward.3} parent=66 // loop_header
                %s611 = sphi 0, %s615
                %p612 = scmp.ge.s32.totalorder %s611, 1
                %s616 = sphi %s599, %s599
                %s617 = sphi %s605, %s605
              $region70: #{model_forward.3} parent=66 // loop_header_branch
                %614 = sbr.rel (%p612) target = $region74
              $region71: #{model_forward.3} parent=66 // loop_body
                %v618 = vld [vmem:[%s616] sm:$0xff]
                %619 = vst [vmem:[%s617] sm:$0xff] %v618
                %v620 = vld [vmem:[%s616 + $0x8] sm:$0xff]
                %621 = vst [vmem:[%s617 + $0x8] sm:$0xff] %v620
                %v622 = vld [vmem:[%s616 + $0x10] sm:$0xff]
                %623 = vst [vmem:[%s617 + $0x10] sm:$0xff] %v622
                %v624 = vld [vmem:[%s616 + $0x18] sm:$0xff]
                %625 = vst [vmem:[%s617 + $0x18] sm:$0xff] %v624
                %v626 = vld [vmem:[%s616 + $0x20] sm:$0xff]
                %627 = vst [vmem:[%s617 + $0x120] sm:$0xff] %v626
                %v628 = vld [vmem:[%s616 + $0x28] sm:$0xff]
                %629 = vst [vmem:[%s617 + $0x128] sm:$0xff] %v628
                %v630 = vld [vmem:[%s616 + $0x30] sm:$0xff]
                %631 = vst [vmem:[%s617 + $0x130] sm:$0xff] %v630
                %v632 = vld [vmem:[%s616 + $0x38] sm:$0xff]
                %633 = vst [vmem:[%s617 + $0x138] sm:$0xff] %v632
              $region72: #{model_forward.3} parent=66 // loop_footer
                %s615 = sadd.s32 1, %s611
              $region73: #{model_forward.3} parent=66 // loop_footer_branch
                %610 = sbr.rel target = $region69
              $region74: #{model_forward.3} parent=66 // loop_exit
                _
            $region67: #{model_forward.3} parent=62 // pred_fallthru
              _
            // Predicated region
            $region75: #{model_forward.3} parent=62 // pred_check
              _
            $region76: #{model_forward.3} parent=62 // pred_check_branch
              %635 = sbr.rel target = $region78
            $region77: #{model_forward.3} parent=62 // pred_region
              _
            $region78: #{model_forward.3} parent=62 // pred_fallthru
              _
          $region63: #{model_forward.3} parent=58 // pred_fallthru
            _
          %636 = vnop
        $region59: #{model_forward.3} parent=50 // pred_fallthru
          _
      $region51: #{model_forward.3} parent=5 // pred_fallthru
        _
      %p637 = scmp.le.s32.totalorder 2, %s9
      // Predicated region
      $region79: #{model_forward.3} parent=5 // pred_check
        %p638 = pneg %p637
      $region80: #{model_forward.3} parent=5 // pred_check_branch
        %640 = sbr.rel (%p638) target = $region82
      $region81: #{model_forward.3} parent=5 // pred_region
        %s641 = ssub.s32 %s9, 2
        // Predicated region
        $region83: #{model_forward.3} parent=81 // pred_check
          %p642 = pneg %p106
        $region84: #{model_forward.3} parent=81 // pred_check_branch
          %644 = sbr.rel (%p642) target = $region86
        $region85: #{model_forward.3} parent=81 // pred_region
          %s645 = sand.u32 %s91, 1
          %s646 = sand.u32 %s91, 1
          %s647 = smul.addr %s646, 64
          %s648 = scalar_lea.vmem [#allocation3], %s647
        $region86: #{model_forward.3} parent=81 // pred_fallthru
          _
      $region82: #{model_forward.3} parent=5 // pred_fallthru
        _
    $region6: #{model_forward.3} parent=1 // loop_footer
      %s13 = sadd.s32 1, %s9
    $region7: #{model_forward.3} parent=1 // loop_footer_branch
      %8 = sbr.rel target = $region3
    $region8: #{model_forward.3} parent=1 // loop_exit
      _

</llo_original>
